<compile_context>
chip_gen: v7x
topology: tpu7x:2x2x1
jax: 0.10.0
libtpu: 0.0.40
codegen_flags: <defaults>
</compile_context>

<pallas_src>
import functools

import jax
import jax.numpy as jnp
from jax.experimental import pallas as pl
from jax.experimental.pallas import tpu as pltpu


def _round_up(x, m):
    return ((x + m - 1) // m) * m


# ---------------------------------------------------------------------------
# Pallas kernel: direct 3x3 conv (9 shifted matmuls) + bias [+residual] [ReLU]
# ---------------------------------------------------------------------------
def _conv_block_kernel(*refs, taps, hw, wo, relu, mode):
    if mode == "proj":
        src_ref, w_ref, b_ref, res_ref, wres_ref, o_ref = refs
    elif mode == "add":
        src_ref, w_ref, b_ref, res_ref, o_ref = refs
    else:
        src_ref, w_ref, b_ref, o_ref = refs

    cpad = o_ref.shape[-1]
    acc = jnp.zeros((hw, cpad), jnp.float32)
    # 9 shifted matmuls on the MXU (bf16 x bf16 -> f32), statically unrolled.
    for t, (g, r) in enumerate(taps):
        win = src_ref[g, r * wo:r * wo + hw, :]            # (hw, Cin) bf16
        acc += jnp.dot(win, w_ref[t], preferred_element_type=jnp.float32)

    acc += b_ref[...]                                      # (1, Cpad) f32
    if mode == "proj":
        # Fused 1x1 projection shortcut (BN scale folded into wres, bias
        # already merged into b_ref).
        acc += jnp.dot(res_ref[...], wres_ref[...],
                       preferred_element_type=jnp.float32)
    elif mode == "add":
        acc += res_ref[...]                                # identity shortcut, f32
    if relu:
        acc = jnp.maximum(acc, 0.0)
    o_ref[...] = acc.astype(o_ref.dtype)


def conv3x3_bn_fused(src, w_taps, bias, taps, n, ho, wo, *, relu,
                     residual=None, res_w=None, out_dtype=jnp.float32):
    """Fused conv3x3 + folded-BN (+ shortcut) + ReLU.

    src:    (N, G, Hg*Wo, Cin) bf16   pre-shifted activation views
    w_taps: (9, Cin, Cpad)     bf16   per-tap weights, BN scale folded in
    bias:   (1, Cpad)          f32
    residual (optional): (N*Ho*Wo, Cr) — f32 (identity add) or bf16 (with res_w)
    res_w    (optional): (Cr, Cpad) bf16 — fused 1x1 projection shortcut
    Returns (N*Ho*Wo, Cpad) in out_dtype.
    """
    hw = ho * wo
    _, ngroups, hgw, cin = src.shape
    cpad = w_taps.shape[-1]
    assert hw % 16 == 0, "Ho*Wo must be a multiple of 16 for this tiling"

    in_specs = [
        pl.BlockSpec((None, ngroups, hgw, cin), lambda i: (i, 0, 0, 0)),
        pl.BlockSpec((9, cin, cpad), lambda i: (0, 0, 0)),
        pl.BlockSpec((1, cpad), lambda i: (0, 0)),
    ]
    args = [src, w_taps, bias]
    flops = 2 * n * hw * cin * cpad * len(taps)

    if residual is not None and res_w is not None:
        mode = "proj"
        rcin = residual.shape[-1]
        in_specs += [pl.BlockSpec((hw, rcin), lambda i: (i, 0)),
                     pl.BlockSpec((rcin, cpad), lambda i: (0, 0))]
        args += [residual, res_w]
        flops += 2 * n * hw * rcin * cpad
    elif residual is not None:
        mode = "add"
        in_specs += [pl.BlockSpec((hw, cpad), lambda i: (i, 0))]
        args += [residual]
    else:
        mode = "none"

    kernel = functools.partial(_conv_block_kernel, taps=taps, hw=hw, wo=wo,
                               relu=relu, mode=mode)
    bytes_accessed = int(sum(int(a.size) * a.dtype.itemsize for a in args)
                         + n * hw * cpad * jnp.dtype(out_dtype).itemsize)

    return pl.pallas_call(
        kernel,
        out_shape=jax.ShapeDtypeStruct((n * hw, cpad), out_dtype),
        grid_spec=pltpu.PrefetchScalarGridSpec(
            num_scalar_prefetch=0,
            grid=(n,),
            in_specs=in_specs,
            out_specs=pl.BlockSpec((hw, cpad), lambda i: (i, 0)),
        ),
        compiler_params=pltpu.CompilerParams(
            dimension_semantics=("parallel",),
            vmem_limit_bytes=32 * 1024 * 1024,
        ),
        cost_estimate=pl.CostEstimate(flops=flops, transcendentals=0,
                                      bytes_accessed=bytes_accessed),
    )(*args)


# ---------------------------------------------------------------------------
# JAX-side prep: shifted activation views (replaces HBM im2col)
# ---------------------------------------------------------------------------
def _build_conv_src(x_nhwc, stride):
    """Build (src, taps, Ho, Wo) for a 3x3, pad=1 conv.

    src: (N, G, Hg*Wo, C) bf16.  Group g is a column-shifted (and, for
    stride 2, row-parity-split) view of the spatially padded input whose
    width is exactly Wo, so every weight tap t=(kh,kw) becomes a contiguous,
    sublane-aligned row-slice of one group inside the kernel.
    taps[t] = (group, row_offset) with t = kh*3 + kw.
    """
    n, h, w, c = x_nhwc.shape
    xb = x_nhwc.astype(jnp.bfloat16)
    xp = jnp.pad(xb, ((0, 0), (1, 1), (1, 1), (0, 0)))
    ho = (h - 1) // stride + 1
    wo = (w - 1) // stride + 1
    if stride == 1:
        groups = [xp[:, :, kw:kw + wo, :] for kw in range(3)]  # (N, H+2, Wo, C)
        hg = h + 2
        taps = [(kw, kh) for kh in range(3) for kw in range(3)]
    elif stride == 2:
        groups = []
        for kw in range(3):
            for rp in range(2):
                groups.append(xp[:, rp::2, kw::2, :][:, :ho + 1, :wo, :])
        hg = ho + 1
        taps = [(2 * kw + (kh % 2), kh // 2)
                for kh in range(3) for kw in range(3)]
    else:
        raise NotImplementedError("stride must be 1 or 2")
    src = jnp.stack(groups, axis=1).reshape(n, len(groups), hg * wo, c)
    return src, taps, ho, wo


# ---------------------------------------------------------------------------
# Parameter prep (done once, outside the per-call forward path)
# ---------------------------------------------------------------------------
def _fold_bn(bn, eps=1e-5):
    scale = bn["gamma"] / jnp.sqrt(bn["running_var"] + eps)
    bias = bn["beta"] - bn["running_mean"] * scale
    return scale, bias


def _prep_conv_weight(w_oihw, scale, cpad):
    """(Cout, Cin, 3, 3) -> (9, Cin, Cpad) bf16 with BN scale folded in."""
    cout, cin = w_oihw.shape[0], w_oihw.shape[1]
    w = jnp.transpose(w_oihw, (2, 3, 1, 0)).reshape(9, cin, cout)  # kh*3+kw major
    w = w * scale[None, None, :]
    w = jnp.pad(w, ((0, 0), (0, 0), (0, cpad - cout)))
    return w.astype(jnp.bfloat16)


def _prep_1x1_weight(w_oihw, scale, cpad):
    cout, cin = w_oihw.shape[0], w_oihw.shape[1]
    w = jnp.transpose(w_oihw, (2, 3, 1, 0)).reshape(cin, cout) * scale[None, :]
    w = jnp.pad(w, ((0, 0), (0, cpad - cout)))
    return w.astype(jnp.bfloat16)


def _pad_bias(b, cpad):
    return jnp.pad(b, (0, cpad - b.shape[0])).reshape(1, cpad).astype(jnp.float32)


def prepare_basic_block(params):
    planes = params["planes"]
    cpad = max(128, _round_up(planes, 128))
    s1, b1 = _fold_bn(params["bn1"])
    s2, b2 = _fold_bn(params["bn2"])
    prep = {
        "stride": params["stride"],
        "planes": planes,
        "cpad": cpad,
        "w1": _prep_conv_weight(params["conv1"], s1, cpad),
        "b1": _pad_bias(b1, cpad),
        "w2": _prep_conv_weight(params["conv2"], s2, cpad),
        "has_proj": "conv_sc" in params,
    }
    if prep["has_proj"]:
        ssc, bsc = _fold_bn(params["bn_sc"])
        prep["w_sc"] = _prep_1x1_weight(params["conv_sc"], ssc, cpad)
        prep["b2"] = _pad_bias(b2 + bsc, cpad)   # conv2 + shortcut bias merged
    else:
        prep["b2"] = _pad_bias(b2, cpad)
    return prep


# ---------------------------------------------------------------------------
# BasicBlock forward (Pallas path)
# ---------------------------------------------------------------------------
def basic_block_forward(x_nchw, prep):
    stride = prep["stride"]
    planes = prep["planes"]
    cpad = prep["cpad"]

    x = jnp.transpose(x_nchw, (0, 2, 3, 1)).astype(jnp.float32)  # NHWC
    n, h, w, cin = x.shape

    # conv1 (3x3, stride) + bn1 + relu  (bf16 intermediate to halve HBM)
    src1, taps1, ho, wo = _build_conv_src(x, stride)
    out1 = conv3x3_bn_fused(src1, prep["w1"], prep["b1"], taps1, n, ho, wo,
                            relu=True, out_dtype=jnp.bfloat16)
    out1 = out1[:, :planes].reshape(n, ho, wo, planes)

    # conv2 (3x3, stride 1) + bn2 + shortcut + relu, fused in one kernel.
    src2, taps2, _, _ = _build_conv_src(out1, 1)
    if prep["has_proj"]:
        xs = x[:, ::stride, ::stride, :].astype(jnp.bfloat16)
        residual = xs.reshape(n * ho * wo, cin)
        out2 = conv3x3_bn_fused(src2, prep["w2"], prep["b2"], taps2, n, ho, wo,
                                relu=True, residual=residual,
                                res_w=prep["w_sc"])
    else:
        residual = jnp.pad(x.reshape(n * h * w, cin),
                           ((0, 0), (0, cpad - cin)))
        out2 = conv3x3_bn_fused(src2, prep["w2"], prep["b2"], taps2, n, ho, wo,
                                relu=True, residual=residual)

    out = out2[:, :planes].reshape(n, ho, wo, planes)
    # TODO(synk): when stacking blocks, keep NHWC end-to-end and drop the
    # per-block NCHW<->NHWC transposes.
    return jnp.transpose(out, (0, 3, 1, 2))


# ---------------------------------------------------------------------------
# Parameter construction + pure-JAX reference for correctness
# ---------------------------------------------------------------------------
def make_basic_block_params(key, in_planes, planes, stride):
    ks = jax.random.split(key, 8)

    def conv_w(k, cout, cin, ksz):
        return 0.1 * jax.random.normal(k, (cout, cin, ksz, ksz), jnp.float32)

    def bn_params(k, c):
        k1, k2, k3, k4 = jax.random.split(k, 4)
        return {
            "gamma": 1.0 + 0.1 * jax.random.normal(k1, (c,), jnp.float32),
            "beta": 0.1 * jax.random.normal(k2, (c,), jnp.float32),
            "running_mean": 0.1 * jax.random.normal(k3, (c,), jnp.float32),
            "running_var": 1.0 + 0.1 * jnp.abs(jax.random.normal(k4, (c,), jnp.float32)),
        }

    params = {
        "conv1": conv_w(ks[0], planes, in_planes, 3),
        "bn1": bn_params(ks[1], planes),
        "conv2": conv_w(ks[2], planes, planes, 3),
        "bn2": bn_params(ks[3], planes),
        "stride": stride,
        "in_planes": in_planes,
        "planes": planes,
    }
    if stride != 1 or in_planes != planes:
        params["conv_sc"] = conv_w(ks[4], planes, in_planes, 1)
        params["bn_sc"] = bn_params(ks[5], planes)
    return params


def _ref_conv(x_nhwc, w_oihw, stride, pad):
    w_hwio = jnp.transpose(w_oihw, (2, 3, 1, 0))
    return jax.lax.conv_general_dilated(
        x_nhwc, w_hwio, (stride, stride), [(pad, pad), (pad, pad)],
        dimension_numbers=("NHWC", "HWIO", "NHWC"))


def basic_block_reference(x_nchw, params):
    stride = params["stride"]
    x = jnp.transpose(x_nchw, (0, 2, 3, 1)).astype(jnp.float32)

    s1, b1 = _fold_bn(params["bn1"])
    out = jnp.maximum(_ref_conv(x, params["conv1"], stride, 1) * s1 + b1, 0.0)

    s2, b2 = _fold_bn(params["bn2"])
    out = _ref_conv(out, params["conv2"], 1, 1) * s2 + b2

    if "conv_sc" in params:
        ssc, bsc = _fold_bn(params["bn_sc"])
        sc = _ref_conv(x, params["conv_sc"], stride, 0) * ssc + bsc
    else:
        sc = x
    out = jnp.maximum(out + sc, 0.0)
    return jnp.transpose(out, (0, 3, 1, 2))


# ---------------------------------------------------------------------------
if __name__ == "__main__":
    key = jax.random.PRNGKey(0)
    kx1, kp1, kx2, kp2 = jax.random.split(key, 4)

    # Case 1: downsampling block (stride=2, channel change) -> fused conv shortcut.
    x1 = jax.random.normal(kx1, (2, 4, 16, 16), jnp.float32)
    params1 = make_basic_block_params(kp1, in_planes=4, planes=8, stride=2)
    prep1 = prepare_basic_block(params1)
    fwd1 = jax.jit(functools.partial(basic_block_forward, prep=prep1))
    y1 = jax.block_until_ready(fwd1(x1))
    r1 = basic_block_reference(x1, params1)
    assert y1.shape == (2, 8, 8, 8)
    assert jnp.allclose(y1, r1, rtol=5e-2, atol=3e-2), \
        float(jnp.max(jnp.abs(y1 - r1)))

    # Case 2: identity shortcut (stride=1, same channels).
    x2 = jax.random.normal(kx2, (2, 8, 16, 16), jnp.float32)
    params2 = make_basic_block_params(kp2, in_planes=8, planes=8, stride=1)
    prep2 = prepare_basic_block(params2)
    fwd2 = jax.jit(functools.partial(basic_block_forward, prep=prep2))
    y2 = jax.block_until_ready(fwd2(x2))
    r2 = basic_block_reference(x2, params2)
    assert y2.shape == (2, 8, 16, 16)
    assert jnp.allclose(y2, r2, rtol=5e-2, atol=3e-2), \
        float(jnp.max(jnp.abs(y2 - r2)))

    print("KERNEL_OK")
</pallas_src>

<mosaic_0001>
module attributes {stable_mosaic.version = 11 : i64} {
  func.func @_conv_block_kernel(%arg0: i32, %arg1: memref<1x6x72x4xbf16, #tpu.memory_space<vmem>>, %arg2: memref<9x4x128xbf16, #tpu.memory_space<vmem>>, %arg3: memref<1x128xf32, #tpu.memory_space<vmem>>, %arg4: memref<64x128xbf16, #tpu.memory_space<vmem>>) attributes {dimension_semantics = [#tpu.dimension_semantics<parallel>], iteration_bounds = array<i64: 2>, scalar_prefetch = 0 : i64, scratch_operands = 0 : i64, tpu.core_type = #tpu.core_type<tc>, window_params = [{transform_indices = @transform_0, window_bounds = array<i64: 1, 6, 72, 4>}, {pipeline_mode = #tpu.pipeline_mode<synchronous>, transform_indices = @transform_1, window_bounds = array<i64: 9, 4, 128>}, {pipeline_mode = #tpu.pipeline_mode<synchronous>, transform_indices = @transform_2, window_bounds = array<i64: 1, 128>}, {transform_indices = @transform_3, window_bounds = array<i64: 64, 128>}]} {
    %cst = arith.constant 0.000000e+00 : f32
    %0 = vector.broadcast %cst : f32 to vector<64x128xf32>
    %c0 = arith.constant 0 : index
    %c0_0 = arith.constant 0 : index
    %c0_1 = arith.constant 0 : index
    %c0_2 = arith.constant 0 : index
    %1 = vector.load %arg1[%c0, %c0_0, %c0_1, %c0_2] : memref<1x6x72x4xbf16, #tpu.memory_space<vmem>>, vector<1x1x64x4xbf16>
    %2 = vector.shape_cast %1 : vector<1x1x64x4xbf16> to vector<64x4xbf16>
    %c0_3 = arith.constant 0 : index
    %c0_4 = arith.constant 0 : index
    %c0_5 = arith.constant 0 : index
    %3 = vector.load %arg2[%c0_3, %c0_4, %c0_5] : memref<9x4x128xbf16, #tpu.memory_space<vmem>>, vector<1x4x128xbf16>
    %4 = vector.shape_cast %3 : vector<1x4x128xbf16> to vector<4x128xbf16>
    %cst_6 = arith.constant dense<0.000000e+00> : vector<64x128xf32>
    %5 = tpu.matmul %2, %4, %cst_6 {dimension_numbers = #tpu.dot_dimension_numbers<[1], [0], [0], [1], [0, 0, 1, 1], [], []>} : vector<64x4xbf16>, vector<4x128xbf16>, vector<64x128xf32> -> vector<64x128xf32>
    %6 = arith.addf %0, %5 : vector<64x128xf32>
    %c0_7 = arith.constant 0 : index
    %c2 = arith.constant 2 : index
    %c0_8 = arith.constant 0 : index
    %c0_9 = arith.constant 0 : index
    %7 = vector.load %arg1[%c0_7, %c2, %c0_8, %c0_9] : memref<1x6x72x4xbf16, #tpu.memory_space<vmem>>, vector<1x1x64x4xbf16>
    %8 = vector.shape_cast %7 : vector<1x1x64x4xbf16> to vector<64x4xbf16>
    %c1 = arith.constant 1 : index
    %c0_10 = arith.constant 0 : index
    %c0_11 = arith.constant 0 : index
    %9 = vector.load %arg2[%c1, %c0_10, %c0_11] : memref<9x4x128xbf16, #tpu.memory_space<vmem>>, vector<1x4x128xbf16>
    %10 = vector.shape_cast %9 : vector<1x4x128xbf16> to vector<4x128xbf16>
    %cst_12 = arith.constant dense<0.000000e+00> : vector<64x128xf32>
    %11 = tpu.matmul %8, %10, %cst_12 {dimension_numbers = #tpu.dot_dimension_numbers<[1], [0], [0], [1], [0, 0, 1, 1], [], []>} : vector<64x4xbf16>, vector<4x128xbf16>, vector<64x128xf32> -> vector<64x128xf32>
    %12 = arith.addf %6, %11 : vector<64x128xf32>
    %c0_13 = arith.constant 0 : index
    %c4 = arith.constant 4 : index
    %c0_14 = arith.constant 0 : index
    %c0_15 = arith.constant 0 : index
    %13 = vector.load %arg1[%c0_13, %c4, %c0_14, %c0_15] : memref<1x6x72x4xbf16, #tpu.memory_space<vmem>>, vector<1x1x64x4xbf16>
    %14 = vector.shape_cast %13 : vector<1x1x64x4xbf16> to vector<64x4xbf16>
    %c2_16 = arith.constant 2 : index
    %c0_17 = arith.constant 0 : index
    %c0_18 = arith.constant 0 : index
    %15 = vector.load %arg2[%c2_16, %c0_17, %c0_18] : memref<9x4x128xbf16, #tpu.memory_space<vmem>>, vector<1x4x128xbf16>
    %16 = vector.shape_cast %15 : vector<1x4x128xbf16> to vector<4x128xbf16>
    %cst_19 = arith.constant dense<0.000000e+00> : vector<64x128xf32>
    %17 = tpu.matmul %14, %16, %cst_19 {dimension_numbers = #tpu.dot_dimension_numbers<[1], [0], [0], [1], [0, 0, 1, 1], [], []>} : vector<64x4xbf16>, vector<4x128xbf16>, vector<64x128xf32> -> vector<64x128xf32>
    %18 = arith.addf %12, %17 : vector<64x128xf32>
    %c0_20 = arith.constant 0 : index
    %c1_21 = arith.constant 1 : index
    %c0_22 = arith.constant 0 : index
    %c0_23 = arith.constant 0 : index
    %19 = vector.load %arg1[%c0_20, %c1_21, %c0_22, %c0_23] : memref<1x6x72x4xbf16, #tpu.memory_space<vmem>>, vector<1x1x64x4xbf16>
    %20 = vector.shape_cast %19 : vector<1x1x64x4xbf16> to vector<64x4xbf16>
    %c3 = arith.constant 3 : index
    %c0_24 = arith.constant 0 : index
    %c0_25 = arith.constant 0 : index
    %21 = vector.load %arg2[%c3, %c0_24, %c0_25] : memref<9x4x128xbf16, #tpu.memory_space<vmem>>, vector<1x4x128xbf16>
    %22 = vector.shape_cast %21 : vector<1x4x128xbf16> to vector<4x128xbf16>
    %cst_26 = arith.constant dense<0.000000e+00> : vector<64x128xf32>
    %23 = tpu.matmul %20, %22, %cst_26 {dimension_numbers = #tpu.dot_dimension_numbers<[1], [0], [0], [1], [0, 0, 1, 1], [], []>} : vector<64x4xbf16>, vector<4x128xbf16>, vector<64x128xf32> -> vector<64x128xf32>
    %24 = arith.addf %18, %23 : vector<64x128xf32>
    %c0_27 = arith.constant 0 : index
    %c3_28 = arith.constant 3 : index
    %c0_29 = arith.constant 0 : index
    %c0_30 = arith.constant 0 : index
    %25 = vector.load %arg1[%c0_27, %c3_28, %c0_29, %c0_30] : memref<1x6x72x4xbf16, #tpu.memory_space<vmem>>, vector<1x1x64x4xbf16>
    %26 = vector.shape_cast %25 : vector<1x1x64x4xbf16> to vector<64x4xbf16>
    %c4_31 = arith.constant 4 : index
    %c0_32 = arith.constant 0 : index
    %c0_33 = arith.constant 0 : index
    %27 = vector.load %arg2[%c4_31, %c0_32, %c0_33] : memref<9x4x128xbf16, #tpu.memory_space<vmem>>, vector<1x4x128xbf16>
    %28 = vector.shape_cast %27 : vector<1x4x128xbf16> to vector<4x128xbf16>
    %cst_34 = arith.constant dense<0.000000e+00> : vector<64x128xf32>
    %29 = tpu.matmul %26, %28, %cst_34 {dimension_numbers = #tpu.dot_dimension_numbers<[1], [0], [0], [1], [0, 0, 1, 1], [], []>} : vector<64x4xbf16>, vector<4x128xbf16>, vector<64x128xf32> -> vector<64x128xf32>
    %30 = arith.addf %24, %29 : vector<64x128xf32>
    %c0_35 = arith.constant 0 : index
    %c5 = arith.constant 5 : index
    %c0_36 = arith.constant 0 : index
    %c0_37 = arith.constant 0 : index
    %31 = vector.load %arg1[%c0_35, %c5, %c0_36, %c0_37] : memref<1x6x72x4xbf16, #tpu.memory_space<vmem>>, vector<1x1x64x4xbf16>
    %32 = vector.shape_cast %31 : vector<1x1x64x4xbf16> to vector<64x4xbf16>
    %c5_38 = arith.constant 5 : index
    %c0_39 = arith.constant 0 : index
    %c0_40 = arith.constant 0 : index
    %33 = vector.load %arg2[%c5_38, %c0_39, %c0_40] : memref<9x4x128xbf16, #tpu.memory_space<vmem>>, vector<1x4x128xbf16>
    %34 = vector.shape_cast %33 : vector<1x4x128xbf16> to vector<4x128xbf16>
    %cst_41 = arith.constant dense<0.000000e+00> : vector<64x128xf32>
    %35 = tpu.matmul %32, %34, %cst_41 {dimension_numbers = #tpu.dot_dimension_numbers<[1], [0], [0], [1], [0, 0, 1, 1], [], []>} : vector<64x4xbf16>, vector<4x128xbf16>, vector<64x128xf32> -> vector<64x128xf32>
    %36 = arith.addf %30, %35 : vector<64x128xf32>
    %c0_42 = arith.constant 0 : index
    %c0_43 = arith.constant 0 : index
    %c8 = arith.constant 8 : index
    %c0_44 = arith.constant 0 : index
    %37 = vector.load %arg1[%c0_42, %c0_43, %c8, %c0_44] : memref<1x6x72x4xbf16, #tpu.memory_space<vmem>>, vector<1x1x64x4xbf16>
    %38 = vector.shape_cast %37 : vector<1x1x64x4xbf16> to vector<64x4xbf16>
    %c6 = arith.constant 6 : index
    %c0_45 = arith.constant 0 : index
    %c0_46 = arith.constant 0 : index
    %39 = vector.load %arg2[%c6, %c0_45, %c0_46] : memref<9x4x128xbf16, #tpu.memory_space<vmem>>, vector<1x4x128xbf16>
    %40 = vector.shape_cast %39 : vector<1x4x128xbf16> to vector<4x128xbf16>
    %cst_47 = arith.constant dense<0.000000e+00> : vector<64x128xf32>
    %41 = tpu.matmul %38, %40, %cst_47 {dimension_numbers = #tpu.dot_dimension_numbers<[1], [0], [0], [1], [0, 0, 1, 1], [], []>} : vector<64x4xbf16>, vector<4x128xbf16>, vector<64x128xf32> -> vector<64x128xf32>
    %42 = arith.addf %36, %41 : vector<64x128xf32>
    %c0_48 = arith.constant 0 : index
    %c2_49 = arith.constant 2 : index
    %c8_50 = arith.constant 8 : index
    %c0_51 = arith.constant 0 : index
    %43 = vector.load %arg1[%c0_48, %c2_49, %c8_50, %c0_51] : memref<1x6x72x4xbf16, #tpu.memory_space<vmem>>, vector<1x1x64x4xbf16>
    %44 = vector.shape_cast %43 : vector<1x1x64x4xbf16> to vector<64x4xbf16>
    %c7 = arith.constant 7 : index
    %c0_52 = arith.constant 0 : index
    %c0_53 = arith.constant 0 : index
    %45 = vector.load %arg2[%c7, %c0_52, %c0_53] : memref<9x4x128xbf16, #tpu.memory_space<vmem>>, vector<1x4x128xbf16>
    %46 = vector.shape_cast %45 : vector<1x4x128xbf16> to vector<4x128xbf16>
    %cst_54 = arith.constant dense<0.000000e+00> : vector<64x128xf32>
    %47 = tpu.matmul %44, %46, %cst_54 {dimension_numbers = #tpu.dot_dimension_numbers<[1], [0], [0], [1], [0, 0, 1, 1], [], []>} : vector<64x4xbf16>, vector<4x128xbf16>, vector<64x128xf32> -> vector<64x128xf32>
    %48 = arith.addf %42, %47 : vector<64x128xf32>
    %c0_55 = arith.constant 0 : index
    %c4_56 = arith.constant 4 : index
    %c8_57 = arith.constant 8 : index
    %c0_58 = arith.constant 0 : index
    %49 = vector.load %arg1[%c0_55, %c4_56, %c8_57, %c0_58] : memref<1x6x72x4xbf16, #tpu.memory_space<vmem>>, vector<1x1x64x4xbf16>
    %50 = vector.shape_cast %49 : vector<1x1x64x4xbf16> to vector<64x4xbf16>
    %c8_59 = arith.constant 8 : index
    %c0_60 = arith.constant 0 : index
    %c0_61 = arith.constant 0 : index
    %51 = vector.load %arg2[%c8_59, %c0_60, %c0_61] : memref<9x4x128xbf16, #tpu.memory_space<vmem>>, vector<1x4x128xbf16>
    %52 = vector.shape_cast %51 : vector<1x4x128xbf16> to vector<4x128xbf16>
    %cst_62 = arith.constant dense<0.000000e+00> : vector<64x128xf32>
    %53 = tpu.matmul %50, %52, %cst_62 {dimension_numbers = #tpu.dot_dimension_numbers<[1], [0], [0], [1], [0, 0, 1, 1], [], []>} : vector<64x4xbf16>, vector<4x128xbf16>, vector<64x128xf32> -> vector<64x128xf32>
    %54 = arith.addf %48, %53 : vector<64x128xf32>
    %c0_63 = arith.constant 0 : index
    %c0_64 = arith.constant 0 : index
    %55 = vector.load %arg3[%c0_63, %c0_64] : memref<1x128xf32, #tpu.memory_space<vmem>>, vector<1x128xf32>
    %56 = vector.broadcast %55 : vector<1x128xf32> to vector<64x128xf32>
    %57 = arith.addf %54, %56 : vector<64x128xf32>
    %cst_65 = arith.constant 0.000000e+00 : f32
    %58 = vector.broadcast %cst_65 : f32 to vector<64x128xf32>
    %59 = arith.maximumf %57, %58 : vector<64x128xf32>
    %60 = arith.truncf %59 : vector<64x128xf32> to vector<64x128xbf16>
    %c0_66 = arith.constant 0 : index
    %c0_67 = arith.constant 0 : index
    %61 = vector.load %arg4[%c0_66, %c0_67] : memref<64x128xbf16, #tpu.memory_space<vmem>>, vector<64x128xbf16>
    tpu.vector_store %arg4[%c0_66, %c0_67], %60 {strides = array<i32>} : memref<64x128xbf16, #tpu.memory_space<vmem>>, vector<64x128xbf16>,
    return
  }
  func.func @transform_0(%arg0: i32) -> (i32, i32, i32, i32) {
    %c0_i32 = arith.constant 0 : i32
    %c0_i32_0 = arith.constant 0 : i32
    %c0_i32_1 = arith.constant 0 : i32
    %c0_i32_2 = arith.constant 0 : i32
    return %arg0, %c0_i32, %c0_i32_0, %c0_i32_1 : i32, i32, i32, i32
  }
  func.func @transform_1(%arg0: i32) -> (i32, i32, i32) {
    %c0_i32 = arith.constant 0 : i32
    %c0_i32_0 = arith.constant 0 : i32
    %c0_i32_1 = arith.constant 0 : i32
    %c0_i32_2 = arith.constant 0 : i32
    return %c0_i32, %c0_i32_0, %c0_i32_1 : i32, i32, i32
  }
  func.func @transform_2(%arg0: i32) -> (i32, i32) {
    %c0_i32 = arith.constant 0 : i32
    %c0_i32_0 = arith.constant 0 : i32
    %c0_i32_1 = arith.constant 0 : i32
    return %c0_i32, %c0_i32_0 : i32, i32
  }
  func.func @transform_3(%arg0: i32) -> (i32, i32) {
    %c0_i32 = arith.constant 0 : i32
    %c0_i32_0 = arith.constant 0 : i32
    return %arg0, %c0_i32 : i32, i32
  }
}

module attributes {stable_mosaic.version = 11 : i64} {
  func.func @_conv_block_kernel(%arg0: i32, %arg1: memref<1x3x80x8xbf16, #tpu.memory_space<vmem>>, %arg2: memref<9x8x128xbf16, #tpu.memory_space<vmem>>, %arg3: memref<1x128xf32, #tpu.memory_space<vmem>>, %arg4: memref<64x4xbf16, #tpu.memory_space<vmem>>, %arg5: memref<4x128xbf16, #tpu.memory_space<vmem>>, %arg6: memref<64x128xf32, #tpu.memory_space<vmem>>) attributes {dimension_semantics = [#tpu.dimension_semantics<parallel>], iteration_bounds = array<i64: 2>, scalar_prefetch = 0 : i64, scratch_operands = 0 : i64, tpu.core_type = #tpu.core_type<tc>, window_params = [{transform_indices = @transform_0, window_bounds = array<i64: 1, 3, 80, 8>}, {pipeline_mode = #tpu.pipeline_mode<synchronous>, transform_indices = @transform_1, window_bounds = array<i64: 9, 8, 128>}, {pipeline_mode = #tpu.pipeline_mode<synchronous>, transform_indices = @transform_2, window_bounds = array<i64: 1, 128>}, {transform_indices = @transform_3, window_bounds = array<i64: 64, 4>}, {pipeline_mode = #tpu.pipeline_mode<synchronous>, transform_indices = @transform_4, window_bounds = array<i64: 4, 128>}, {transform_indices = @transform_5, window_bounds = array<i64: 64, 128>}]} {
    %cst = arith.constant 0.000000e+00 : f32
    %0 = vector.broadcast %cst : f32 to vector<64x128xf32>
    %c0 = arith.constant 0 : index
    %c0_0 = arith.constant 0 : index
    %c0_1 = arith.constant 0 : index
    %c0_2 = arith.constant 0 : index
    %1 = vector.load %arg1[%c0, %c0_0, %c0_1, %c0_2] : memref<1x3x80x8xbf16, #tpu.memory_space<vmem>>, vector<1x1x64x8xbf16>
    %2 = vector.shape_cast %1 : vector<1x1x64x8xbf16> to vector<64x8xbf16>
    %c0_3 = arith.constant 0 : index
    %c0_4 = arith.constant 0 : index
    %c0_5 = arith.constant 0 : index
    %3 = vector.load %arg2[%c0_3, %c0_4, %c0_5] : memref<9x8x128xbf16, #tpu.memory_space<vmem>>, vector<1x8x128xbf16>
    %4 = vector.shape_cast %3 : vector<1x8x128xbf16> to vector<8x128xbf16>
    %cst_6 = arith.constant dense<0.000000e+00> : vector<64x128xf32>
    %5 = tpu.matmul %2, %4, %cst_6 {dimension_numbers = #tpu.dot_dimension_numbers<[1], [0], [0], [1], [0, 0, 1, 1], [], []>} : vector<64x8xbf16>, vector<8x128xbf16>, vector<64x128xf32> -> vector<64x128xf32>
    %6 = arith.addf %0, %5 : vector<64x128xf32>
    %c0_7 = arith.constant 0 : index
    %c1 = arith.constant 1 : index
    %c0_8 = arith.constant 0 : index
    %c0_9 = arith.constant 0 : index
    %7 = vector.load %arg1[%c0_7, %c1, %c0_8, %c0_9] : memref<1x3x80x8xbf16, #tpu.memory_space<vmem>>, vector<1x1x64x8xbf16>
    %8 = vector.shape_cast %7 : vector<1x1x64x8xbf16> to vector<64x8xbf16>
    %c1_10 = arith.constant 1 : index
    %c0_11 = arith.constant 0 : index
    %c0_12 = arith.constant 0 : index
    %9 = vector.load %arg2[%c1_10, %c0_11, %c0_12] : memref<9x8x128xbf16, #tpu.memory_space<vmem>>, vector<1x8x128xbf16>
    %10 = vector.shape_cast %9 : vector<1x8x128xbf16> to vector<8x128xbf16>
    %cst_13 = arith.constant dense<0.000000e+00> : vector<64x128xf32>
    %11 = tpu.matmul %8, %10, %cst_13 {dimension_numbers = #tpu.dot_dimension_numbers<[1], [0], [0], [1], [0, 0, 1, 1], [], []>} : vector<64x8xbf16>, vector<8x128xbf16>, vector<64x128xf32> -> vector<64x128xf32>
    %12 = arith.addf %6, %11 : vector<64x128xf32>
    %c0_14 = arith.constant 0 : index
    %c2 = arith.constant 2 : index
    %c0_15 = arith.constant 0 : index
    %c0_16 = arith.constant 0 : index
    %13 = vector.load %arg1[%c0_14, %c2, %c0_15, %c0_16] : memref<1x3x80x8xbf16, #tpu.memory_space<vmem>>, vector<1x1x64x8xbf16>
    %14 = vector.shape_cast %13 : vector<1x1x64x8xbf16> to vector<64x8xbf16>
    %c2_17 = arith.constant 2 : index
    %c0_18 = arith.constant 0 : index
    %c0_19 = arith.constant 0 : index
    %15 = vector.load %arg2[%c2_17, %c0_18, %c0_19] : memref<9x8x128xbf16, #tpu.memory_space<vmem>>, vector<1x8x128xbf16>
    %16 = vector.shape_cast %15 : vector<1x8x128xbf16> to vector<8x128xbf16>
    %cst_20 = arith.constant dense<0.000000e+00> : vector<64x128xf32>
    %17 = tpu.matmul %14, %16, %cst_20 {dimension_numbers = #tpu.dot_dimension_numbers<[1], [0], [0], [1], [0, 0, 1, 1], [], []>} : vector<64x8xbf16>, vector<8x128xbf16>, vector<64x128xf32> -> vector<64x128xf32>
    %18 = arith.addf %12, %17 : vector<64x128xf32>
    %c0_21 = arith.constant 0 : index
    %c0_22 = arith.constant 0 : index
    %c8 = arith.constant 8 : index
    %c0_23 = arith.constant 0 : index
    %19 = vector.load %arg1[%c0_21, %c0_22, %c8, %c0_23] : memref<1x3x80x8xbf16, #tpu.memory_space<vmem>>, vector<1x1x64x8xbf16>
    %20 = vector.shape_cast %19 : vector<1x1x64x8xbf16> to vector<64x8xbf16>
    %c3 = arith.constant 3 : index
    %c0_24 = arith.constant 0 : index
    %c0_25 = arith.constant 0 : index
    %21 = vector.load %arg2[%c3, %c0_24, %c0_25] : memref<9x8x128xbf16, #tpu.memory_space<vmem>>, vector<1x8x128xbf16>
    %22 = vector.shape_cast %21 : vector<1x8x128xbf16> to vector<8x128xbf16>
    %cst_26 = arith.constant dense<0.000000e+00> : vector<64x128xf32>
    %23 = tpu.matmul %20, %22, %cst_26 {dimension_numbers = #tpu.dot_dimension_numbers<[1], [0], [0], [1], [0, 0, 1, 1], [], []>} : vector<64x8xbf16>, vector<8x128xbf16>, vector<64x128xf32> -> vector<64x128xf32>
    %24 = arith.addf %18, %23 : vector<64x128xf32>
    %c0_27 = arith.constant 0 : index
    %c1_28 = arith.constant 1 : index
    %c8_29 = arith.constant 8 : index
    %c0_30 = arith.constant 0 : index
    %25 = vector.load %arg1[%c0_27, %c1_28, %c8_29, %c0_30] : memref<1x3x80x8xbf16, #tpu.memory_space<vmem>>, vector<1x1x64x8xbf16>
    %26 = vector.shape_cast %25 : vector<1x1x64x8xbf16> to vector<64x8xbf16>
    %c4 = arith.constant 4 : index
    %c0_31 = arith.constant 0 : index
    %c0_32 = arith.constant 0 : index
    %27 = vector.load %arg2[%c4, %c0_31, %c0_32] : memref<9x8x128xbf16, #tpu.memory_space<vmem>>, vector<1x8x128xbf16>
    %28 = vector.shape_cast %27 : vector<1x8x128xbf16> to vector<8x128xbf16>
    %cst_33 = arith.constant dense<0.000000e+00> : vector<64x128xf32>
    %29 = tpu.matmul %26, %28, %cst_33 {dimension_numbers = #tpu.dot_dimension_numbers<[1], [0], [0], [1], [0, 0, 1, 1], [], []>} : vector<64x8xbf16>, vector<8x128xbf16>, vector<64x128xf32> -> vector<64x128xf32>
    %30 = arith.addf %24, %29 : vector<64x128xf32>
    %c0_34 = arith.constant 0 : index
    %c2_35 = arith.constant 2 : index
    %c8_36 = arith.constant 8 : index
    %c0_37 = arith.constant 0 : index
    %31 = vector.load %arg1[%c0_34, %c2_35, %c8_36, %c0_37] : memref<1x3x80x8xbf16, #tpu.memory_space<vmem>>, vector<1x1x64x8xbf16>
    %32 = vector.shape_cast %31 : vector<1x1x64x8xbf16> to vector<64x8xbf16>
    %c5 = arith.constant 5 : index
    %c0_38 = arith.constant 0 : index
    %c0_39 = arith.constant 0 : index
    %33 = vector.load %arg2[%c5, %c0_38, %c0_39] : memref<9x8x128xbf16, #tpu.memory_space<vmem>>, vector<1x8x128xbf16>
    %34 = vector.shape_cast %33 : vector<1x8x128xbf16> to vector<8x128xbf16>
    %cst_40 = arith.constant dense<0.000000e+00> : vector<64x128xf32>
    %35 = tpu.matmul %32, %34, %cst_40 {dimension_numbers = #tpu.dot_dimension_numbers<[1], [0], [0], [1], [0, 0, 1, 1], [], []>} : vector<64x8xbf16>, vector<8x128xbf16>, vector<64x128xf32> -> vector<64x128xf32>
    %36 = arith.addf %30, %35 : vector<64x128xf32>
    %c0_41 = arith.constant 0 : index
    %c0_42 = arith.constant 0 : index
    %c16 = arith.constant 16 : index
    %c0_43 = arith.constant 0 : index
    %37 = vector.load %arg1[%c0_41, %c0_42, %c16, %c0_43] : memref<1x3x80x8xbf16, #tpu.memory_space<vmem>>, vector<1x1x64x8xbf16>
    %38 = vector.shape_cast %37 : vector<1x1x64x8xbf16> to vector<64x8xbf16>
    %c6 = arith.constant 6 : index
    %c0_44 = arith.constant 0 : index
    %c0_45 = arith.constant 0 : index
    %39 = vector.load %arg2[%c6, %c0_44, %c0_45] : memref<9x8x128xbf16, #tpu.memory_space<vmem>>, vector<1x8x128xbf16>
    %40 = vector.shape_cast %39 : vector<1x8x128xbf16> to vector<8x128xbf16>
    %cst_46 = arith.constant dense<0.000000e+00> : vector<64x128xf32>
    %41 = tpu.matmul %38, %40, %cst_46 {dimension_numbers = #tpu.dot_dimension_numbers<[1], [0], [0], [1], [0, 0, 1, 1], [], []>} : vector<64x8xbf16>, vector<8x128xbf16>, vector<64x128xf32> -> vector<64x128xf32>
    %42 = arith.addf %36, %41 : vector<64x128xf32>
    %c0_47 = arith.constant 0 : index
    %c1_48 = arith.constant 1 : index
    %c16_49 = arith.constant 16 : index
    %c0_50 = arith.constant 0 : index
    %43 = vector.load %arg1[%c0_47, %c1_48, %c16_49, %c0_50] : memref<1x3x80x8xbf16, #tpu.memory_space<vmem>>, vector<1x1x64x8xbf16>
    %44 = vector.shape_cast %43 : vector<1x1x64x8xbf16> to vector<64x8xbf16>
    %c7 = arith.constant 7 : index
    %c0_51 = arith.constant 0 : index
    %c0_52 = arith.constant 0 : index
    %45 = vector.load %arg2[%c7, %c0_51, %c0_52] : memref<9x8x128xbf16, #tpu.memory_space<vmem>>, vector<1x8x128xbf16>
    %46 = vector.shape_cast %45 : vector<1x8x128xbf16> to vector<8x128xbf16>
    %cst_53 = arith.constant dense<0.000000e+00> : vector<64x128xf32>
    %47 = tpu.matmul %44, %46, %cst_53 {dimension_numbers = #tpu.dot_dimension_numbers<[1], [0], [0], [1], [0, 0, 1, 1], [], []>} : vector<64x8xbf16>, vector<8x128xbf16>, vector<64x128xf32> -> vector<64x128xf32>
    %48 = arith.addf %42, %47 : vector<64x128xf32>
    %c0_54 = arith.constant 0 : index
    %c2_55 = arith.constant 2 : index
    %c16_56 = arith.constant 16 : index
    %c0_57 = arith.constant 0 : index
    %49 = vector.load %arg1[%c0_54, %c2_55, %c16_56, %c0_57] : memref<1x3x80x8xbf16, #tpu.memory_space<vmem>>, vector<1x1x64x8xbf16>
    %50 = vector.shape_cast %49 : vector<1x1x64x8xbf16> to vector<64x8xbf16>
    %c8_58 = arith.constant 8 : index
    %c0_59 = arith.constant 0 : index
    %c0_60 = arith.constant 0 : index
    %51 = vector.load %arg2[%c8_58, %c0_59, %c0_60] : memref<9x8x128xbf16, #tpu.memory_space<vmem>>, vector<1x8x128xbf16>
    %52 = vector.shape_cast %51 : vector<1x8x128xbf16> to vector<8x128xbf16>
    %cst_61 = arith.constant dense<0.000000e+00> : vector<64x128xf32>
    %53 = tpu.matmul %50, %52, %cst_61 {dimension_numbers = #tpu.dot_dimension_numbers<[1], [0], [0], [1], [0, 0, 1, 1], [], []>} : vector<64x8xbf16>, vector<8x128xbf16>, vector<64x128xf32> -> vector<64x128xf32>
    %54 = arith.addf %48, %53 : vector<64x128xf32>
    %c0_62 = arith.constant 0 : index
    %c0_63 = arith.constant 0 : index
    %55 = vector.load %arg3[%c0_62, %c0_63] : memref<1x128xf32, #tpu.memory_space<vmem>>, vector<1x128xf32>
    %56 = vector.broadcast %55 : vector<1x128xf32> to vector<64x128xf32>
    %57 = arith.addf %54, %56 : vector<64x128xf32>
    %c0_64 = arith.constant 0 : index
    %c0_65 = arith.constant 0 : index
    %58 = vector.load %arg4[%c0_64, %c0_65] : memref<64x4xbf16, #tpu.memory_space<vmem>>, vector<64x4xbf16>
    %c0_66 = arith.constant 0 : index
    %c0_67 = arith.constant 0 : index
    %59 = vector.load %arg5[%c0_66, %c0_67] : memref<4x128xbf16, #tpu.memory_space<vmem>>, vector<4x128xbf16>
    %cst_68 = arith.constant dense<0.000000e+00> : vector<64x128xf32>
    %60 = tpu.matmul %58, %59, %cst_68 {dimension_numbers = #tpu.dot_dimension_numbers<[1], [0], [0], [1], [0, 0, 1, 1], [], []>} : vector<64x4xbf16>, vector<4x128xbf16>, vector<64x128xf32> -> vector<64x128xf32>
    %61 = arith.addf %57, %60 : vector<64x128xf32>
    %cst_69 = arith.constant 0.000000e+00 : f32
    %62 = vector.broadcast %cst_69 : f32 to vector<64x128xf32>
    %63 = arith.maximumf %61, %62 : vector<64x128xf32>
    %c0_70 = arith.constant 0 : index
    %c0_71 = arith.constant 0 : index
    %64 = vector.load %arg6[%c0_70, %c0_71] : memref<64x128xf32, #tpu.memory_space<vmem>>, vector<64x128xf32>
    tpu.vector_store %arg6[%c0_70, %c0_71], %63 {strides = array<i32>} : memref<64x128xf32, #tpu.memory_space<vmem>>, vector<64x128xf32>,
    return
  }
  func.func @transform_0(%arg0: i32) -> (i32, i32, i32, i32) {
    %c0_i32 = arith.constant 0 : i32
    %c0_i32_0 = arith.constant 0 : i32
    %c0_i32_1 = arith.constant 0 : i32
    %c0_i32_2 = arith.constant 0 : i32
    return %arg0, %c0_i32, %c0_i32_0, %c0_i32_1 : i32, i32, i32, i32
  }
  func.func @transform_1(%arg0: i32) -> (i32, i32, i32) {
    %c0_i32 = arith.constant 0 : i32
    %c0_i32_0 = arith.constant 0 : i32
    %c0_i32_1 = arith.constant 0 : i32
    %c0_i32_2 = arith.constant 0 : i32
    return %c0_i32, %c0_i32_0, %c0_i32_1 : i32, i32, i32
  }
  func.func @transform_2(%arg0: i32) -> (i32, i32) {
    %c0_i32 = arith.constant 0 : i32
    %c0_i32_0 = arith.constant 0 : i32
    %c0_i32_1 = arith.constant 0 : i32
    return %c0_i32, %c0_i32_0 : i32, i32
  }
  func.func @transform_3(%arg0: i32) -> (i32, i32) {
    %c0_i32 = arith.constant 0 : i32
    %c0_i32_0 = arith.constant 0 : i32
    return %arg0, %c0_i32 : i32, i32
  }
  func.func @transform_4(%arg0: i32) -> (i32, i32) {
    %c0_i32 = arith.constant 0 : i32
    %c0_i32_0 = arith.constant 0 : i32
    %c0_i32_1 = arith.constant 0 : i32
    return %c0_i32, %c0_i32_0 : i32, i32
  }
  func.func @transform_5(%arg0: i32) -> (i32, i32) {
    %c0_i32 = arith.constant 0 : i32
    %c0_i32_0 = arith.constant 0 : i32
    return %arg0, %c0_i32 : i32, i32
  }
}

</mosaic_0001>

<llo_original>
// kernel: basic_block_forward.2
$region0: #{basic_block_forward.2}
  #allocation0 [shape = 'u32[]', space=smem, size = 0x4, offset = 0x4, fixed_abs, tag = 'smem constant byte address 0x4 - core index']
  #allocation1 [shape = 'u32[144,128]{1,0:T(1,128)}', space=vmem, size = 0x12000, scoped, tag = 'internal scratch']
  %s0 = inlined_call_operand.vmem [shape: bf16[2,6,72,4], index: 0, kind: input, shape index: {}]
  %s1 = inlined_call_operand.vmem [shape: bf16[9,4,128], index: 1, kind: input, shape index: {}]
  %s2 = inlined_call_operand.vmem [shape: f32[1,128], index: 2, kind: input, shape index: {}]
  %s3 = inlined_call_operand.vmem [shape: bf16[128,128], index: 3, kind: output, shape index: {}]
  %s4 = sld [smem:[#allocation0]]
  $region45: #{basic_block_forward.2} parent=0
    _
  %s6 = ssub.s32 1, %s4
  %s7 = scalar_select 0, %s6, %s4
  loop: start=0, step=1, limit=4
  $region2: #{basic_block_forward.2} parent=0 // loop_pre_header
    _
  $region3: #{basic_block_forward.2} parent=0 // loop_header
    %s9 = sphi 0, %s13
    %p10 = scmp.ge.s32.totalorder %s9, 4
    %s19 = sphi 0, %s21
    %s22 = sphi 0, %s19
    %s23 = sphi 0, %s22
    %s39 = sphi 0, %s23
    %s43 = sphi 0, %s43
    %s45 = sphi 0, %s43
    %s46 = sphi 0, %s45
    %s60 = sphi 0, %s46
    %s64 = sphi 0, %s64
    %s66 = sphi 0, %s64
    %s67 = sphi 0, %s66
    %s81 = sphi 0, %s67
    %s87 = sphi 0, %s89
    %s90 = sphi 0, %s87
    %s91 = sphi 0, %s90
    %s107 = sphi 0, %s91
  $region4: #{basic_block_forward.2} parent=0 // loop_header_branch
    %12 = sbr.rel (%p10) target = $region8
  $region5: #{basic_block_forward.2} parent=0 // loop_body
    %s14 = ssub.s32 %s9, 1
    %s15 = ssub.s32 %s9, 2
    %s16 = sadd.s32 %s9, 1
    %s17 = ssub.s32 %s9, %s16
    %p18 = scmp.eq.s32.totalorder %s17, 0
    %s20 = sadd.s32 %s19, 1
    %s21 = scalar_select %p18, %s19, %s20
    %p24 = pneg %p18
    %p25 = scmp.eq.s32.totalorder %s9, 1
    %p26 = por %p24, %p25
    %p27 = scmp.ne.s32.totalorder %s19, %s22
    %p28 = scmp.eq.s32.totalorder %s9, 0
    %p29 = por %p27, %p28
    %p30 = scmp.ne.s32.totalorder %s19, %s22
    %p31 = scmp.eq.s32.totalorder %s14, 1
    %p32 = por %p30, %p31
    %p33 = scmp.ne.s32.totalorder %s22, %s23
    %p34 = scmp.eq.s32.totalorder %s14, 0
    %p35 = por %p33, %p34
    %p36 = scmp.ne.s32.totalorder %s22, %s23
    %p37 = scmp.eq.s32.totalorder %s15, 1
    %p38 = por %p36, %p37
    %p40 = scmp.ne.s32.totalorder %s23, %s39
    %p41 = scmp.eq.s32.totalorder %s15, 0
    %p42 = por %p40, %p41
    %s44 = sadd.s32 %s43, 1
    %p47 = scmp.eq.s32.totalorder %s9, 1
    %p48 = scmp.ne.s32.totalorder %s43, %s45
    %p49 = scmp.eq.s32.totalorder %s9, 0
    %p50 = por %p48, %p49
    %p51 = scmp.ne.s32.totalorder %s43, %s45
    %p52 = scmp.eq.s32.totalorder %s14, 1
    %p53 = por %p51, %p52
    %p54 = scmp.ne.s32.totalorder %s45, %s46
    %p55 = scmp.eq.s32.totalorder %s14, 0
    %p56 = por %p54, %p55
    %p57 = scmp.ne.s32.totalorder %s45, %s46
    %p58 = scmp.eq.s32.totalorder %s15, 1
    %p59 = por %p57, %p58
    %p61 = scmp.ne.s32.totalorder %s46, %s60
    %p62 = scmp.eq.s32.totalorder %s15, 0
    %p63 = por %p61, %p62
    %s65 = sadd.s32 %s64, 1
    %p68 = scmp.eq.s32.totalorder %s9, 1
    %p69 = scmp.ne.s32.totalorder %s64, %s66
    %p70 = scmp.eq.s32.totalorder %s9, 0
    %p71 = por %p69, %p70
    %p72 = scmp.ne.s32.totalorder %s64, %s66
    %p73 = scmp.eq.s32.totalorder %s14, 1
    %p74 = por %p72, %p73
    %p75 = scmp.ne.s32.totalorder %s66, %s67
    %p76 = scmp.eq.s32.totalorder %s14, 0
    %p77 = por %p75, %p76
    %p78 = scmp.ne.s32.totalorder %s66, %s67
    %p79 = scmp.eq.s32.totalorder %s15, 1
    %p80 = por %p78, %p79
    %p82 = scmp.ne.s32.totalorder %s67, %s81
    %p83 = scmp.eq.s32.totalorder %s15, 0
    %p84 = por %p82, %p83
    %s85 = ssub.s32 %s9, %s16
    %p86 = scmp.eq.s32.totalorder %s85, 0
    %s88 = sadd.s32 %s87, 1
    %s89 = scalar_select %p86, %s87, %s88
    %p92 = pneg %p86
    %p93 = scmp.eq.s32.totalorder %s9, 1
    %p94 = por %p92, %p93
    %p95 = scmp.ne.s32.totalorder %s87, %s90
    %p96 = scmp.eq.s32.totalorder %s9, 0
    %p97 = por %p95, %p96
    %p98 = scmp.ne.s32.totalorder %s87, %s90
    %p99 = scmp.eq.s32.totalorder %s14, 1
    %p100 = por %p98, %p99
    %p101 = scmp.ne.s32.totalorder %s90, %s91
    %p102 = scmp.eq.s32.totalorder %s14, 0
    %p103 = por %p101, %p102
    %p104 = scmp.ne.s32.totalorder %s90, %s91
    %p105 = scmp.eq.s32.totalorder %s15, 1
    %p106 = por %p104, %p105
    %p108 = scmp.ne.s32.totalorder %s91, %s107
    %p109 = scmp.eq.s32.totalorder %s15, 0
    %p110 = por %p108, %p109
    %p111 = scmp.le.s32.totalorder 1, %s9
    %p112 = scmp.lt.s32.totalorder %s9, 3
    %p113 = pnand %p111, %p112
    %p114 = pneg %p113
    // Predicated region
    $region9: #{basic_block_forward.2} parent=5 // pred_check
      _
    $region10: #{basic_block_forward.2} parent=5 // pred_check_branch
      %116 = sbr.rel (%p113) target = $region12
    $region11: #{basic_block_forward.2} parent=5 // pred_region
      %s117 = ssub.s32 %s9, 1
      // Predicated region
      $region13: #{basic_block_forward.2} parent=11 // pred_check
        %p118 = pneg %p56
      $region14: #{basic_block_forward.2} parent=11 // pred_check_branch
        %120 = sbr.rel (%p118) target = $region16
      $region15: #{basic_block_forward.2} parent=11 // pred_region
        _
      $region16: #{basic_block_forward.2} parent=11 // pred_fallthru
        _
      // Predicated region
      $region17: #{basic_block_forward.2} parent=11 // pred_check
        %p121 = pneg %p77
      $region18: #{basic_block_forward.2} parent=11 // pred_check_branch
        %123 = sbr.rel (%p121) target = $region20
      $region19: #{basic_block_forward.2} parent=11 // pred_region
        _
      $region20: #{basic_block_forward.2} parent=11 // pred_fallthru
        _
    $region12: #{basic_block_forward.2} parent=5 // pred_fallthru
      _
    %p124 = scmp.lt.s32.totalorder %s9, 2
    // Predicated region
    $region21: #{basic_block_forward.2} parent=5 // pred_check
      %p125 = pneg %p124
    $region22: #{basic_block_forward.2} parent=5 // pred_check_branch
      %127 = sbr.rel (%p125) target = $region24
    $region23: #{basic_block_forward.2} parent=5 // pred_region
      // Predicated region
      $region25: #{basic_block_forward.2} parent=23 // pred_check
        %p128 = pneg %p29
      $region26: #{basic_block_forward.2} parent=23 // pred_check_branch
        %130 = sbr.rel (%p128) target = $region28
      $region27: #{basic_block_forward.2} parent=23 // pred_region
        %p131 = scmp.lt.s32.totalorder %s9, 1
        %s132 = scalar_select %p131, %s9, 1
        %s133 = smul.addr %s132, 54
        %s134 = smul.addr %s133, 4
        %s135 = scalar_lea.vmem %s0, %s134
      $region28: #{basic_block_forward.2} parent=23 // pred_fallthru
        _
    $region24: #{basic_block_forward.2} parent=5 // pred_fallthru
      _
    %p136 = scmp.le.s32.totalorder 1, %s9
    %p137 = scmp.lt.s32.totalorder %s9, 3
    %p138 = pnand %p136, %p137
    %p139 = pneg %p138
    // Predicated region
    $region29: #{basic_block_forward.2} parent=5 // pred_check
      _
    $region30: #{basic_block_forward.2} parent=5 // pred_check_branch
      %141 = sbr.rel (%p138) target = $region32
    $region31: #{basic_block_forward.2} parent=5 // pred_region
      %s142 = ssub.s32 %s9, 1
      %p143 = scmp.lt.s32.totalorder %s14, 1
      %s144 = scalar_select %p143, %s14, 1
      %s145 = smul.addr %s144, 54
      %s146 = smul.addr %s145, 4
      %s147 = scalar_lea.vmem %s0, %s146
      %p148 = pneg %p35
      %p149 = pneg %p32
      %p150 = pneg %p56
      %p151 = pneg %p53
      %p152 = pneg %p77
      %p153 = pneg %p74
      %p154 = pneg %p103
      %p155 = pneg %p100
      %s156 = smul.u32 8, %s14
      %p157 = scmp.lt.s32.totalorder %s156, 15
      %s158 = scalar_select %p157, %s156, 15
      %s159 = smul.addr %s158, 4
      %s160 = scalar_lea.vmem %s3, %s159
      %p161 = scmp.lt.s32.totalorder %s14, 1
      %s162 = scalar_select %p161, %s14, 1
      %s163 = smul.addr %s162, 54
      %s164 = smul.addr %s163, 4
      %s165 = scalar_lea.vmem %s0, %s164
      %s166 = smul.u32 8, %s14
      %p167 = scmp.lt.s32.totalorder %s166, 15
      %s168 = scalar_select %p167, %s166, 15
      %s169 = smul.addr %s168, 4
      %s170 = scalar_lea.vmem %s3, %s169
      %s171 = smul.u32 8, %s14
      %v173 = vld [vmem:[%s165] sm:$0xf]
      %v174 = vld [vmem:[%s165 + $0x4] sm:$0xf]
      %v175 = vld [vmem:[%s165 + $0x8] sm:$0xf]
      %v176 = vld [vmem:[%s165 + $0xc] sm:$0xf]
      %v177 = vld [vmem:[%s165 + $0x10] sm:$0xf]
      %v178 = vld [vmem:[%s165 + $0x14] sm:$0xf]
      %v179 = vld [vmem:[%s165 + $0x18] sm:$0xf]
      %v180 = vld [vmem:[%s165 + $0x1c] sm:$0xf]
      %v181 = vld [vmem:[%s1] sm:$0x3]
      %s182 = scalar_lea.vmem %s165, 72
      %v183 = vld [vmem:[%s182] sm:$0xf]
      %v184 = vld [vmem:[%s182 + $0x4] sm:$0xf]
      %v185 = vld [vmem:[%s182 + $0x8] sm:$0xf]
      %v186 = vld [vmem:[%s182 + $0xc] sm:$0xf]
      %v187 = vld [vmem:[%s182 + $0x10] sm:$0xf]
      %v188 = vld [vmem:[%s182 + $0x14] sm:$0xf]
      %v189 = vld [vmem:[%s182 + $0x18] sm:$0xf]
      %v190 = vld [vmem:[%s182 + $0x1c] sm:$0xf]
      %s191 = scalar_lea.vmem %s1, 2
      %v192 = vld [vmem:[%s191] sm:$0x3]
      %v201 = vunpack.c.l.b16 %v183
      %v202 = vunpack.c.l.b16 %v184
      %v203 = vunpack.c.l.b16 %v185
      %v204 = vunpack.c.l.b16 %v186
      %v205 = vunpack.c.l.b16 %v187
      %v206 = vunpack.c.l.b16 %v188
      %v207 = vunpack.c.l.b16 %v189
      %v208 = vunpack.c.l.b16 %v190
      %v209 = vpack.c.b16 %v202, %v201
      %v210 = vpack.c.b16 %v204, %v203
      %v211 = vpack.c.b16 %v206, %v205
      %v212 = vpack.c.b16 %v208, %v207
      %vm213 = vcmask 31744
      %v215 = vsel %vm213, %v209, 0
      %v218 = vsel %vm213, %v210, 0
      %v221 = vsel %vm213, %v211, 0
      %v224 = vsel %vm213, %v212, 0
      %vm226 = vcmask 1041408
      %v228 = vsel %vm226, %v192, 0
      %230 = vmatprep.subr.bf16.mxu0 0
      %231 = vmatpush1.bf16.msra.mxu0 %v228
      %232 = vmatprep.subr.bf16.mxu0 0
      %233 = vmatpush1.bf16.msra.mxu0 0
      %234 = vmatprep.subr.bf16.mxu0 0
      %235 = vmatpush1.bf16.msra.mxu0 0
      %236 = vmatprep.subr.bf16.mxu0 0
      %237 = vmatpush1.bf16.msra.mxu0 0
      %238 = vmatprep.subr.bf16.mxu0 0
      %239 = vmatpush1.bf16.msra.mxu0 0
      %240 = vmatprep.subr.bf16.mxu0 0
      %241 = vmatpush1.bf16.msra.mxu0 0
      %242 = vmatprep.subr.bf16.mxu0 0
      %243 = vmatpush1.bf16.msra.mxu0 0
      %244 = vmatprep.subr.bf16.mxu0 0
      %245 = vmatpush1.bf16.msra.mxu0 0
      %246 = vmatprep.subr.bf16.mxu0 0
      %247 = vmatpush1.bf16.msra.mxu0 0
      %248 = vmatprep.subr.bf16.mxu0 0
      %249 = vmatpush1.bf16.msra.mxu0 0
      %250 = vmatprep.subr.bf16.mxu0 0
      %251 = vmatpush1.bf16.msra.mxu0 0
      %252 = vmatprep.subr.bf16.mxu0 0
      %253 = vmatpush1.bf16.msra.mxu0 0
      %254 = vmatprep.subr.bf16.mxu0 0
      %255 = vmatpush1.bf16.msra.mxu0 0
      %256 = vmatprep.subr.bf16.mxu0 0
      %257 = vmatpush1.bf16.msra.mxu0 0
      %258 = vmatprep.subr.bf16.mxu0 0
      %259 = vmatpush1.bf16.msra.mxu0 0
      %260 = vmatprep.subr.bf16.mxu0 0
      %261 = vmatpush1.bf16.msra.mxu0 0
      %262 = vmatprep.mubr.bf16.mxu0 0
      %263 = vmatmul.mubr.bf16.gmra.mrb[0].mxu0 %v215
      %v264 = vpop.f32.mrb[0].mxu0
      %v265 = vadd.f32 0.0, %v264
      %v266 = vpop.f32.mrb[0].mxu0
      %v267 = vpop.f32.mrb[0].mxu0
      %v268 = vadd.f32 0.0, %v267
      %v269 = vpop.f32.mrb[0].mxu0
      %270 = vmatprep.mubr.bf16.mxu0 0
      %271 = vmatmul.mubr.bf16.gmra.mrb[0].mxu0 %v218
      %v272 = vpop.f32.mrb[0].mxu0
      %v273 = vadd.f32 0.0, %v272
      %v274 = vpop.f32.mrb[0].mxu0
      %v275 = vpop.f32.mrb[0].mxu0
      %v276 = vadd.f32 0.0, %v275
      %v277 = vpop.f32.mrb[0].mxu0
      %278 = vmatprep.mubr.bf16.mxu0 0
      %279 = vmatmul.mubr.bf16.gmra.mrb[0].mxu0 %v221
      %v280 = vpop.f32.mrb[0].mxu0
      %v281 = vadd.f32 0.0, %v280
      %v282 = vpop.f32.mrb[0].mxu0
      %v283 = vpop.f32.mrb[0].mxu0
      %v284 = vadd.f32 0.0, %v283
      %v285 = vpop.f32.mrb[0].mxu0
      %286 = vmatprep.mubr.bf16.mxu0 0
      %287 = vmatmul.mubr.bf16.gmra.mrb[0].mxu0 %v224
      %v288 = vpop.f32.mrb[0].mxu0
      %v289 = vadd.f32 0.0, %v288
      %v290 = vpop.f32.mrb[0].mxu0
      %v291 = vpop.f32.mrb[0].mxu0
      %v292 = vadd.f32 0.0, %v291
      %v293 = vpop.f32.mrb[0].mxu0
      %294 = vdwg.mxu0
      %v303 = vunpack.c.l.b16 %v173
      %v304 = vunpack.c.l.b16 %v174
      %v305 = vunpack.c.l.b16 %v175
      %v306 = vunpack.c.l.b16 %v176
      %v307 = vunpack.c.l.b16 %v177
      %v308 = vunpack.c.l.b16 %v178
      %v309 = vunpack.c.l.b16 %v179
      %v310 = vunpack.c.l.b16 %v180
      %v311 = vpack.c.b16 %v304, %v303
      %v312 = vpack.c.b16 %v306, %v305
      %v313 = vpack.c.b16 %v308, %v307
      %v314 = vpack.c.b16 %v310, %v309
      %v316 = vsel %vm213, %v311, 0
      %v319 = vsel %vm213, %v312, 0
      %v322 = vsel %vm213, %v313, 0
      %v325 = vsel %vm213, %v314, 0
      %v328 = vsel %vm226, %v181, 0
      %330 = vmatprep.subr.bf16.mxu0 0
      %331 = vmatpush1.bf16.msra.mxu0 %v328
      %332 = vmatprep.subr.bf16.mxu0 0
      %333 = vmatpush1.bf16.msra.mxu0 0
      %334 = vmatprep.subr.bf16.mxu0 0
      %335 = vmatpush1.bf16.msra.mxu0 0
      %336 = vmatprep.subr.bf16.mxu0 0
      %337 = vmatpush1.bf16.msra.mxu0 0
      %338 = vmatprep.subr.bf16.mxu0 0
      %339 = vmatpush1.bf16.msra.mxu0 0
      %340 = vmatprep.subr.bf16.mxu0 0
      %341 = vmatpush1.bf16.msra.mxu0 0
      %342 = vmatprep.subr.bf16.mxu0 0
      %343 = vmatpush1.bf16.msra.mxu0 0
      %344 = vmatprep.subr.bf16.mxu0 0
      %345 = vmatpush1.bf16.msra.mxu0 0
      %346 = vmatprep.subr.bf16.mxu0 0
      %347 = vmatpush1.bf16.msra.mxu0 0
      %348 = vmatprep.subr.bf16.mxu0 0
      %349 = vmatpush1.bf16.msra.mxu0 0
      %350 = vmatprep.subr.bf16.mxu0 0
      %351 = vmatpush1.bf16.msra.mxu0 0
      %352 = vmatprep.subr.bf16.mxu0 0
      %353 = vmatpush1.bf16.msra.mxu0 0
      %354 = vmatprep.subr.bf16.mxu0 0
      %355 = vmatpush1.bf16.msra.mxu0 0
      %356 = vmatprep.subr.bf16.mxu0 0
      %357 = vmatpush1.bf16.msra.mxu0 0
      %358 = vmatprep.subr.bf16.mxu0 0
      %359 = vmatpush1.bf16.msra.mxu0 0
      %360 = vmatprep.subr.bf16.mxu0 0
      %361 = vmatpush1.bf16.msra.mxu0 0
      %362 = vmatprep.mubr.bf16.mxu0 0
      %363 = vmatmul.mubr.bf16.gmra.mrb[0].mxu0 %v316
      %v364 = vpop.f32.mrb[0].mxu0
      %v365 = vadd.f32 %v265, %v364
      %v366 = vpop.f32.mrb[0].mxu0
      %v367 = vpop.f32.mrb[0].mxu0
      %v368 = vadd.f32 %v268, %v367
      %v369 = vpop.f32.mrb[0].mxu0
      %370 = vmatprep.mubr.bf16.mxu0 0
      %371 = vmatmul.mubr.bf16.gmra.mrb[0].mxu0 %v319
      %v372 = vpop.f32.mrb[0].mxu0
      %v373 = vadd.f32 %v273, %v372
      %v374 = vpop.f32.mrb[0].mxu0
      %v375 = vpop.f32.mrb[0].mxu0
      %v376 = vadd.f32 %v276, %v375
      %v377 = vpop.f32.mrb[0].mxu0
      %378 = vmatprep.mubr.bf16.mxu0 0
      %379 = vmatmul.mubr.bf16.gmra.mrb[0].mxu0 %v322
      %v380 = vpop.f32.mrb[0].mxu0
      %v381 = vadd.f32 %v281, %v380
      %v382 = vpop.f32.mrb[0].mxu0
      %v383 = vpop.f32.mrb[0].mxu0
      %v384 = vadd.f32 %v284, %v383
      %v385 = vpop.f32.mrb[0].mxu0
      %386 = vmatprep.mubr.bf16.mxu0 0
      %387 = vmatmul.mubr.bf16.gmra.mrb[0].mxu0 %v325
      %v388 = vpop.f32.mrb[0].mxu0
      %v389 = vadd.f32 %v289, %v388
      %v390 = vpop.f32.mrb[0].mxu0
      %v391 = vpop.f32.mrb[0].mxu0
      %v392 = vadd.f32 %v292, %v391
      %v393 = vpop.f32.mrb[0].mxu0
      %394 = vdwg.mxu0
      %s395 = scalar_lea.vmem %s165, 144
      %v396 = vld [vmem:[%s395] sm:$0xf]
      %v397 = vld [vmem:[%s395 + $0x4] sm:$0xf]
      %v398 = vld [vmem:[%s395 + $0x8] sm:$0xf]
      %v399 = vld [vmem:[%s395 + $0xc] sm:$0xf]
      %v400 = vld [vmem:[%s395 + $0x10] sm:$0xf]
      %v401 = vld [vmem:[%s395 + $0x14] sm:$0xf]
      %v402 = vld [vmem:[%s395 + $0x18] sm:$0xf]
      %v403 = vld [vmem:[%s395 + $0x1c] sm:$0xf]
      %s404 = scalar_lea.vmem %s1, 4
      %v405 = vld [vmem:[%s404] sm:$0x3]
      %v414 = vunpack.c.l.b16 %v396
      %v415 = vunpack.c.l.b16 %v397
      %v416 = vunpack.c.l.b16 %v398
      %v417 = vunpack.c.l.b16 %v399
      %v418 = vunpack.c.l.b16 %v400
      %v419 = vunpack.c.l.b16 %v401
      %v420 = vunpack.c.l.b16 %v402
      %v421 = vunpack.c.l.b16 %v403
      %v422 = vpack.c.b16 %v415, %v414
      %v423 = vpack.c.b16 %v417, %v416
      %v424 = vpack.c.b16 %v419, %v418
      %v425 = vpack.c.b16 %v421, %v420
      %v427 = vsel %vm213, %v422, 0
      %v430 = vsel %vm213, %v423, 0
      %v433 = vsel %vm213, %v424, 0
      %v436 = vsel %vm213, %v425, 0
      %v439 = vsel %vm226, %v405, 0
      %441 = vmatprep.subr.bf16.mxu0 0
      %442 = vmatpush1.bf16.msra.mxu0 %v439
      %443 = vmatprep.subr.bf16.mxu0 0
      %444 = vmatpush1.bf16.msra.mxu0 0
      %445 = vmatprep.subr.bf16.mxu0 0
      %446 = vmatpush1.bf16.msra.mxu0 0
      %447 = vmatprep.subr.bf16.mxu0 0
      %448 = vmatpush1.bf16.msra.mxu0 0
      %449 = vmatprep.subr.bf16.mxu0 0
      %450 = vmatpush1.bf16.msra.mxu0 0
      %451 = vmatprep.subr.bf16.mxu0 0
      %452 = vmatpush1.bf16.msra.mxu0 0
      %453 = vmatprep.subr.bf16.mxu0 0
      %454 = vmatpush1.bf16.msra.mxu0 0
      %455 = vmatprep.subr.bf16.mxu0 0
      %456 = vmatpush1.bf16.msra.mxu0 0
      %457 = vmatprep.subr.bf16.mxu0 0
      %458 = vmatpush1.bf16.msra.mxu0 0
      %459 = vmatprep.subr.bf16.mxu0 0
      %460 = vmatpush1.bf16.msra.mxu0 0
      %461 = vmatprep.subr.bf16.mxu0 0
      %462 = vmatpush1.bf16.msra.mxu0 0
      %463 = vmatprep.subr.bf16.mxu0 0
      %464 = vmatpush1.bf16.msra.mxu0 0
      %465 = vmatprep.subr.bf16.mxu0 0
      %466 = vmatpush1.bf16.msra.mxu0 0
      %467 = vmatprep.subr.bf16.mxu0 0
      %468 = vmatpush1.bf16.msra.mxu0 0
      %469 = vmatprep.subr.bf16.mxu0 0
      %470 = vmatpush1.bf16.msra.mxu0 0
      %471 = vmatprep.subr.bf16.mxu0 0
      %472 = vmatpush1.bf16.msra.mxu0 0
      %473 = vmatprep.mubr.bf16.mxu0 0
      %474 = vmatmul.mubr.bf16.gmra.mrb[0].mxu0 %v427
      %v475 = vpop.f32.mrb[0].mxu0
      %v476 = vadd.f32 0.0, %v475
      %v477 = vpop.f32.mrb[0].mxu0
      %v478 = vpop.f32.mrb[0].mxu0
      %v479 = vadd.f32 0.0, %v478
      %v480 = vpop.f32.mrb[0].mxu0
      %481 = vmatprep.mubr.bf16.mxu0 0
      %482 = vmatmul.mubr.bf16.gmra.mrb[0].mxu0 %v430
      %v483 = vpop.f32.mrb[0].mxu0
      %v484 = vadd.f32 0.0, %v483
      %v485 = vpop.f32.mrb[0].mxu0
      %v486 = vpop.f32.mrb[0].mxu0
      %v487 = vadd.f32 0.0, %v486
      %v488 = vpop.f32.mrb[0].mxu0
      %489 = vmatprep.mubr.bf16.mxu0 0
      %490 = vmatmul.mubr.bf16.gmra.mrb[0].mxu0 %v433
      %v491 = vpop.f32.mrb[0].mxu0
      %v492 = vadd.f32 0.0, %v491
      %v493 = vpop.f32.mrb[0].mxu0
      %v494 = vpop.f32.mrb[0].mxu0
      %v495 = vadd.f32 0.0, %v494
      %v496 = vpop.f32.mrb[0].mxu0
      %497 = vmatprep.mubr.bf16.mxu0 0
      %498 = vmatmul.mubr.bf16.gmra.mrb[0].mxu0 %v436
      %v499 = vpop.f32.mrb[0].mxu0
      %v500 = vadd.f32 0.0, %v499
      %v501 = vpop.f32.mrb[0].mxu0
      %v502 = vpop.f32.mrb[0].mxu0
      %v503 = vadd.f32 0.0, %v502
      %v504 = vpop.f32.mrb[0].mxu0
      %505 = vdwg.mxu0
      %v506 = vadd.f32 %v365, %v476
      %v507 = vadd.f32 %v368, %v479
      %v508 = vadd.f32 %v373, %v484
      %v509 = vadd.f32 %v376, %v487
      %v510 = vadd.f32 %v381, %v492
      %v511 = vadd.f32 %v384, %v495
      %v512 = vadd.f32 %v389, %v500
      %v513 = vadd.f32 %v392, %v503
      %s514 = scalar_lea.vmem %s165, 36
      %v515 = vld [vmem:[%s514] sm:$0xf]
      %v516 = vld [vmem:[%s514 + $0x4] sm:$0xf]
      %v517 = vld [vmem:[%s514 + $0x8] sm:$0xf]
      %v518 = vld [vmem:[%s514 + $0xc] sm:$0xf]
      %v519 = vld [vmem:[%s514 + $0x10] sm:$0xf]
      %v520 = vld [vmem:[%s514 + $0x14] sm:$0xf]
      %v521 = vld [vmem:[%s514 + $0x18] sm:$0xf]
      %v522 = vld [vmem:[%s514 + $0x1c] sm:$0xf]
      %s523 = scalar_lea.vmem %s1, 6
      %v524 = vld [vmem:[%s523] sm:$0x3]
      %v533 = vunpack.c.l.b16 %v515
      %v534 = vunpack.c.l.b16 %v516
      %v535 = vunpack.c.l.b16 %v517
      %v536 = vunpack.c.l.b16 %v518
      %v537 = vunpack.c.l.b16 %v519
      %v538 = vunpack.c.l.b16 %v520
      %v539 = vunpack.c.l.b16 %v521
      %v540 = vunpack.c.l.b16 %v522
      %v541 = vpack.c.b16 %v534, %v533
      %v542 = vpack.c.b16 %v536, %v535
      %v543 = vpack.c.b16 %v538, %v537
      %v544 = vpack.c.b16 %v540, %v539
      %v546 = vsel %vm213, %v541, 0
      %v549 = vsel %vm213, %v542, 0
      %v552 = vsel %vm213, %v543, 0
      %v555 = vsel %vm213, %v544, 0
      %v558 = vsel %vm226, %v524, 0
      %560 = vmatprep.subr.bf16.mxu0 0
      %561 = vmatpush1.bf16.msra.mxu0 %v558
      %562 = vmatprep.subr.bf16.mxu0 0
      %563 = vmatpush1.bf16.msra.mxu0 0
      %564 = vmatprep.subr.bf16.mxu0 0
      %565 = vmatpush1.bf16.msra.mxu0 0
      %566 = vmatprep.subr.bf16.mxu0 0
      %567 = vmatpush1.bf16.msra.mxu0 0
      %568 = vmatprep.subr.bf16.mxu0 0
      %569 = vmatpush1.bf16.msra.mxu0 0
      %570 = vmatprep.subr.bf16.mxu0 0
      %571 = vmatpush1.bf16.msra.mxu0 0
      %572 = vmatprep.subr.bf16.mxu0 0
      %573 = vmatpush1.bf16.msra.mxu0 0
      %574 = vmatprep.subr.bf16.mxu0 0
      %575 = vmatpush1.bf16.msra.mxu0 0
      %576 = vmatprep.subr.bf16.mxu0 0
      %577 = vmatpush1.bf16.msra.mxu0 0
      %578 = vmatprep.subr.bf16.mxu0 0
      %579 = vmatpush1.bf16.msra.mxu0 0
      %580 = vmatprep.subr.bf16.mxu0 0
      %581 = vmatpush1.bf16.msra.mxu0 0
      %582 = vmatprep.subr.bf16.mxu0 0
      %583 = vmatpush1.bf16.msra.mxu0 0
      %584 = vmatprep.subr.bf16.mxu0 0
      %585 = vmatpush1.bf16.msra.mxu0 0
      %586 = vmatprep.subr.bf16.mxu0 0
      %587 = vmatpush1.bf16.msra.mxu0 0
      %588 = vmatprep.subr.bf16.mxu0 0
      %589 = vmatpush1.bf16.msra.mxu0 0
      %590 = vmatprep.subr.bf16.mxu0 0
      %591 = vmatpush1.bf16.msra.mxu0 0
      %592 = vmatprep.mubr.bf16.mxu0 0
      %593 = vmatmul.mubr.bf16.gmra.mrb[0].mxu0 %v546
      %v594 = vpop.f32.mrb[0].mxu0
      %v595 = vadd.f32 0.0, %v594
      %v596 = vpop.f32.mrb[0].mxu0
      %v597 = vpop.f32.mrb[0].mxu0
      %v598 = vadd.f32 0.0, %v597
      %v599 = vpop.f32.mrb[0].mxu0
      %600 = vmatprep.mubr.bf16.mxu0 0
      %601 = vmatmul.mubr.bf16.gmra.mrb[0].mxu0 %v549
      %v602 = vpop.f32.mrb[0].mxu0
      %v603 = vadd.f32 0.0, %v602
      %v604 = vpop.f32.mrb[0].mxu0
      %v605 = vpop.f32.mrb[0].mxu0
      %v606 = vadd.f32 0.0, %v605
      %v607 = vpop.f32.mrb[0].mxu0
      %608 = vmatprep.mubr.bf16.mxu0 0
      %609 = vmatmul.mubr.bf16.gmra.mrb[0].mxu0 %v552
      %v610 = vpop.f32.mrb[0].mxu0
      %v611 = vadd.f32 0.0, %v610
      %v612 = vpop.f32.mrb[0].mxu0
      %v613 = vpop.f32.mrb[0].mxu0
      %v614 = vadd.f32 0.0, %v613
      %v615 = vpop.f32.mrb[0].mxu0
      %616 = vmatprep.mubr.bf16.mxu0 0
      %617 = vmatmul.mubr.bf16.gmra.mrb[0].mxu0 %v555
      %v618 = vpop.f32.mrb[0].mxu0
      %v619 = vadd.f32 0.0, %v618
      %v620 = vpop.f32.mrb[0].mxu0
      %v621 = vpop.f32.mrb[0].mxu0
      %v622 = vadd.f32 0.0, %v621
      %v623 = vpop.f32.mrb[0].mxu0
      %624 = vdwg.mxu0
      %v625 = vadd.f32 %v506, %v595
      %v626 = vadd.f32 %v507, %v598
      %v627 = vadd.f32 %v508, %v603
      %v628 = vadd.f32 %v509, %v606
      %v629 = vadd.f32 %v510, %v611
      %v630 = vadd.f32 %v511, %v614
      %v631 = vadd.f32 %v512, %v619
      %v632 = vadd.f32 %v513, %v622
      %s633 = scalar_lea.vmem %s165, 108
      %v634 = vld [vmem:[%s633] sm:$0xf]
      %v635 = vld [vmem:[%s633 + $0x4] sm:$0xf]
      %v636 = vld [vmem:[%s633 + $0x8] sm:$0xf]
      %v637 = vld [vmem:[%s633 + $0xc] sm:$0xf]
      %v638 = vld [vmem:[%s633 + $0x10] sm:$0xf]
      %v639 = vld [vmem:[%s633 + $0x14] sm:$0xf]
      %v640 = vld [vmem:[%s633 + $0x18] sm:$0xf]
      %v641 = vld [vmem:[%s633 + $0x1c] sm:$0xf]
      %s642 = scalar_lea.vmem %s1, 8
      %v643 = vld [vmem:[%s642] sm:$0x3]
      %v652 = vunpack.c.l.b16 %v634
      %v653 = vunpack.c.l.b16 %v635
      %v654 = vunpack.c.l.b16 %v636
      %v655 = vunpack.c.l.b16 %v637
      %v656 = vunpack.c.l.b16 %v638
      %v657 = vunpack.c.l.b16 %v639
      %v658 = vunpack.c.l.b16 %v640
      %v659 = vunpack.c.l.b16 %v641
      %v660 = vpack.c.b16 %v653, %v652
      %v661 = vpack.c.b16 %v655, %v654
      %v662 = vpack.c.b16 %v657, %v656
      %v663 = vpack.c.b16 %v659, %v658
      %v665 = vsel %vm213, %v660, 0
      %v668 = vsel %vm213, %v661, 0
      %v671 = vsel %vm213, %v662, 0
      %v674 = vsel %vm213, %v663, 0
      %v677 = vsel %vm226, %v643, 0
      %679 = vmatprep.subr.bf16.mxu0 0
      %680 = vmatpush1.bf16.msra.mxu0 %v677
      %681 = vmatprep.subr.bf16.mxu0 0
      %682 = vmatpush1.bf16.msra.mxu0 0
      %683 = vmatprep.subr.bf16.mxu0 0
      %684 = vmatpush1.bf16.msra.mxu0 0
      %685 = vmatprep.subr.bf16.mxu0 0
      %686 = vmatpush1.bf16.msra.mxu0 0
      %687 = vmatprep.subr.bf16.mxu0 0
      %688 = vmatpush1.bf16.msra.mxu0 0
      %689 = vmatprep.subr.bf16.mxu0 0
      %690 = vmatpush1.bf16.msra.mxu0 0
      %691 = vmatprep.subr.bf16.mxu0 0
      %692 = vmatpush1.bf16.msra.mxu0 0
      %693 = vmatprep.subr.bf16.mxu0 0
      %694 = vmatpush1.bf16.msra.mxu0 0
      %695 = vmatprep.subr.bf16.mxu0 0
      %696 = vmatpush1.bf16.msra.mxu0 0
      %697 = vmatprep.subr.bf16.mxu0 0
      %698 = vmatpush1.bf16.msra.mxu0 0
      %699 = vmatprep.subr.bf16.mxu0 0
      %700 = vmatpush1.bf16.msra.mxu0 0
      %701 = vmatprep.subr.bf16.mxu0 0
      %702 = vmatpush1.bf16.msra.mxu0 0
      %703 = vmatprep.subr.bf16.mxu0 0
      %704 = vmatpush1.bf16.msra.mxu0 0
      %705 = vmatprep.subr.bf16.mxu0 0
      %706 = vmatpush1.bf16.msra.mxu0 0
      %707 = vmatprep.subr.bf16.mxu0 0
      %708 = vmatpush1.bf16.msra.mxu0 0
      %709 = vmatprep.subr.bf16.mxu0 0
      %710 = vmatpush1.bf16.msra.mxu0 0
      %711 = vmatprep.mubr.bf16.mxu0 0
      %712 = vmatmul.mubr.bf16.gmra.mrb[0].mxu0 %v665
      %v713 = vpop.f32.mrb[0].mxu0
      %v714 = vadd.f32 0.0, %v713
      %v715 = vpop.f32.mrb[0].mxu0
      %v716 = vpop.f32.mrb[0].mxu0
      %v717 = vadd.f32 0.0, %v716
      %v718 = vpop.f32.mrb[0].mxu0
      %719 = vmatprep.mubr.bf16.mxu0 0
      %720 = vmatmul.mubr.bf16.gmra.mrb[0].mxu0 %v668
      %v721 = vpop.f32.mrb[0].mxu0
      %v722 = vadd.f32 0.0, %v721
      %v723 = vpop.f32.mrb[0].mxu0
      %v724 = vpop.f32.mrb[0].mxu0
      %v725 = vadd.f32 0.0, %v724
      %v726 = vpop.f32.mrb[0].mxu0
      %727 = vmatprep.mubr.bf16.mxu0 0
      %728 = vmatmul.mubr.bf16.gmra.mrb[0].mxu0 %v671
      %v729 = vpop.f32.mrb[0].mxu0
      %v730 = vadd.f32 0.0, %v729
      %v731 = vpop.f32.mrb[0].mxu0
      %v732 = vpop.f32.mrb[0].mxu0
      %v733 = vadd.f32 0.0, %v732
      %v734 = vpop.f32.mrb[0].mxu0
      %735 = vmatprep.mubr.bf16.mxu0 0
      %736 = vmatmul.mubr.bf16.gmra.mrb[0].mxu0 %v674
      %v737 = vpop.f32.mrb[0].mxu0
      %v738 = vadd.f32 0.0, %v737
      %v739 = vpop.f32.mrb[0].mxu0
      %v740 = vpop.f32.mrb[0].mxu0
      %v741 = vadd.f32 0.0, %v740
      %v742 = vpop.f32.mrb[0].mxu0
      %743 = vdwg.mxu0
      %v744 = vadd.f32 %v625, %v714
      %v745 = vadd.f32 %v626, %v717
      %v746 = vadd.f32 %v627, %v722
      %v747 = vadd.f32 %v628, %v725
      %v748 = vadd.f32 %v629, %v730
      %v749 = vadd.f32 %v630, %v733
      %v750 = vadd.f32 %v631, %v738
      %v751 = vadd.f32 %v632, %v741
      %s752 = scalar_lea.vmem %s165, 180
      %v753 = vld [vmem:[%s752] sm:$0xf]
      %v754 = vld [vmem:[%s752 + $0x4] sm:$0xf]
      %v755 = vld [vmem:[%s752 + $0x8] sm:$0xf]
      %v756 = vld [vmem:[%s752 + $0xc] sm:$0xf]
      %v757 = vld [vmem:[%s752 + $0x10] sm:$0xf]
      %v758 = vld [vmem:[%s752 + $0x14] sm:$0xf]
      %v759 = vld [vmem:[%s752 + $0x18] sm:$0xf]
      %v760 = vld [vmem:[%s752 + $0x1c] sm:$0xf]
      %s761 = scalar_lea.vmem %s1, 10
      %v762 = vld [vmem:[%s761] sm:$0x3]
      %v771 = vunpack.c.l.b16 %v753
      %v772 = vunpack.c.l.b16 %v754
      %v773 = vunpack.c.l.b16 %v755
      %v774 = vunpack.c.l.b16 %v756
      %v775 = vunpack.c.l.b16 %v757
      %v776 = vunpack.c.l.b16 %v758
      %v777 = vunpack.c.l.b16 %v759
      %v778 = vunpack.c.l.b16 %v760
      %v779 = vpack.c.b16 %v772, %v771
      %v780 = vpack.c.b16 %v774, %v773
      %v781 = vpack.c.b16 %v776, %v775
      %v782 = vpack.c.b16 %v778, %v777
      %v784 = vsel %vm213, %v779, 0
      %v787 = vsel %vm213, %v780, 0
      %v790 = vsel %vm213, %v781, 0
      %v793 = vsel %vm213, %v782, 0
      %v796 = vsel %vm226, %v762, 0
      %798 = vmatprep.subr.bf16.mxu0 0
      %799 = vmatpush1.bf16.msra.mxu0 %v796
      %800 = vmatprep.subr.bf16.mxu0 0
      %801 = vmatpush1.bf16.msra.mxu0 0
      %802 = vmatprep.subr.bf16.mxu0 0
      %803 = vmatpush1.bf16.msra.mxu0 0
      %804 = vmatprep.subr.bf16.mxu0 0
      %805 = vmatpush1.bf16.msra.mxu0 0
      %806 = vmatprep.subr.bf16.mxu0 0
      %807 = vmatpush1.bf16.msra.mxu0 0
      %808 = vmatprep.subr.bf16.mxu0 0
      %809 = vmatpush1.bf16.msra.mxu0 0
      %810 = vmatprep.subr.bf16.mxu0 0
      %811 = vmatpush1.bf16.msra.mxu0 0
      %812 = vmatprep.subr.bf16.mxu0 0
      %813 = vmatpush1.bf16.msra.mxu0 0
      %814 = vmatprep.subr.bf16.mxu0 0
      %815 = vmatpush1.bf16.msra.mxu0 0
      %816 = vmatprep.subr.bf16.mxu0 0
      %817 = vmatpush1.bf16.msra.mxu0 0
      %818 = vmatprep.subr.bf16.mxu0 0
      %819 = vmatpush1.bf16.msra.mxu0 0
      %820 = vmatprep.subr.bf16.mxu0 0
      %821 = vmatpush1.bf16.msra.mxu0 0
      %822 = vmatprep.subr.bf16.mxu0 0
      %823 = vmatpush1.bf16.msra.mxu0 0
      %824 = vmatprep.subr.bf16.mxu0 0
      %825 = vmatpush1.bf16.msra.mxu0 0
      %826 = vmatprep.subr.bf16.mxu0 0
      %827 = vmatpush1.bf16.msra.mxu0 0
      %828 = vmatprep.subr.bf16.mxu0 0
      %829 = vmatpush1.bf16.msra.mxu0 0
      %830 = vmatprep.mubr.bf16.mxu0 0
      %831 = vmatmul.mubr.bf16.gmra.mrb[0].mxu0 %v784
      %v832 = vpop.f32.mrb[0].mxu0
      %v833 = vadd.f32 0.0, %v832
      %v834 = vpop.f32.mrb[0].mxu0
      %v835 = vpop.f32.mrb[0].mxu0
      %v836 = vadd.f32 0.0, %v835
      %v837 = vpop.f32.mrb[0].mxu0
      %838 = vmatprep.mubr.bf16.mxu0 0
      %839 = vmatmul.mubr.bf16.gmra.mrb[0].mxu0 %v787
      %v840 = vpop.f32.mrb[0].mxu0
      %v841 = vadd.f32 0.0, %v840
      %v842 = vpop.f32.mrb[0].mxu0
      %v843 = vpop.f32.mrb[0].mxu0
      %v844 = vadd.f32 0.0, %v843
      %v845 = vpop.f32.mrb[0].mxu0
      %846 = vmatprep.mubr.bf16.mxu0 0
      %847 = vmatmul.mubr.bf16.gmra.mrb[0].mxu0 %v790
      %v848 = vpop.f32.mrb[0].mxu0
      %v849 = vadd.f32 0.0, %v848
      %v850 = vpop.f32.mrb[0].mxu0
      %v851 = vpop.f32.mrb[0].mxu0
      %v852 = vadd.f32 0.0, %v851
      %v853 = vpop.f32.mrb[0].mxu0
      %854 = vmatprep.mubr.bf16.mxu0 0
      %855 = vmatmul.mubr.bf16.gmra.mrb[0].mxu0 %v793
      %v856 = vpop.f32.mrb[0].mxu0
      %v857 = vadd.f32 0.0, %v856
      %v858 = vpop.f32.mrb[0].mxu0
      %v859 = vpop.f32.mrb[0].mxu0
      %v860 = vadd.f32 0.0, %v859
      %v861 = vpop.f32.mrb[0].mxu0
      %862 = vdwg.mxu0
      %v863 = vadd.f32 %v744, %v833
      %v864 = vadd.f32 %v745, %v836
      %v865 = vadd.f32 %v746, %v841
      %v866 = vadd.f32 %v747, %v844
      %v867 = vadd.f32 %v748, %v849
      %v868 = vadd.f32 %v749, %v852
      %v869 = vadd.f32 %v750, %v857
      %v870 = vadd.f32 %v751, %v860
      %v871 = vld [vmem:[%s165 + $0x4] sm:$0xf]
      %v872 = vld [vmem:[%s165 + $0x8] sm:$0xf]
      %v873 = vld [vmem:[%s165 + $0xc] sm:$0xf]
      %v874 = vld [vmem:[%s165 + $0x10] sm:$0xf]
      %v875 = vld [vmem:[%s165 + $0x14] sm:$0xf]
      %v876 = vld [vmem:[%s165 + $0x18] sm:$0xf]
      %v877 = vld [vmem:[%s165 + $0x1c] sm:$0xf]
      %v878 = vld [vmem:[%s165 + $0x20] sm:$0xf]
      %s879 = scalar_lea.vmem %s1, 12
      %v880 = vld [vmem:[%s879] sm:$0x3]
      %v889 = vunpack.c.l.b16 %v871
      %v890 = vunpack.c.l.b16 %v872
      %v891 = vunpack.c.l.b16 %v873
      %v892 = vunpack.c.l.b16 %v874
      %v893 = vunpack.c.l.b16 %v875
      %v894 = vunpack.c.l.b16 %v876
      %v895 = vunpack.c.l.b16 %v877
      %v896 = vunpack.c.l.b16 %v878
      %v897 = vpack.c.b16 %v890, %v889
      %v898 = vpack.c.b16 %v892, %v891
      %v899 = vpack.c.b16 %v894, %v893
      %v900 = vpack.c.b16 %v896, %v895
      %v902 = vsel %vm213, %v897, 0
      %v905 = vsel %vm213, %v898, 0
      %v908 = vsel %vm213, %v899, 0
      %v911 = vsel %vm213, %v900, 0
      %v914 = vsel %vm226, %v880, 0
      %916 = vmatprep.subr.bf16.mxu0 0
      %917 = vmatpush1.bf16.msra.mxu0 %v914
      %918 = vmatprep.subr.bf16.mxu0 0
      %919 = vmatpush1.bf16.msra.mxu0 0
      %920 = vmatprep.subr.bf16.mxu0 0
      %921 = vmatpush1.bf16.msra.mxu0 0
      %922 = vmatprep.subr.bf16.mxu0 0
      %923 = vmatpush1.bf16.msra.mxu0 0
      %924 = vmatprep.subr.bf16.mxu0 0
      %925 = vmatpush1.bf16.msra.mxu0 0
      %926 = vmatprep.subr.bf16.mxu0 0
      %927 = vmatpush1.bf16.msra.mxu0 0
      %928 = vmatprep.subr.bf16.mxu0 0
      %929 = vmatpush1.bf16.msra.mxu0 0
      %930 = vmatprep.subr.bf16.mxu0 0
      %931 = vmatpush1.bf16.msra.mxu0 0
      %932 = vmatprep.subr.bf16.mxu0 0
      %933 = vmatpush1.bf16.msra.mxu0 0
      %934 = vmatprep.subr.bf16.mxu0 0
      %935 = vmatpush1.bf16.msra.mxu0 0
      %936 = vmatprep.subr.bf16.mxu0 0
      %937 = vmatpush1.bf16.msra.mxu0 0
      %938 = vmatprep.subr.bf16.mxu0 0
      %939 = vmatpush1.bf16.msra.mxu0 0
      %940 = vmatprep.subr.bf16.mxu0 0
      %941 = vmatpush1.bf16.msra.mxu0 0
      %942 = vmatprep.subr.bf16.mxu0 0
      %943 = vmatpush1.bf16.msra.mxu0 0
      %944 = vmatprep.subr.bf16.mxu0 0
      %945 = vmatpush1.bf16.msra.mxu0 0
      %946 = vmatprep.subr.bf16.mxu0 0
      %947 = vmatpush1.bf16.msra.mxu0 0
      %948 = vmatprep.mubr.bf16.mxu0 0
      %949 = vmatmul.mubr.bf16.gmra.mrb[0].mxu0 %v902
      %v950 = vpop.f32.mrb[0].mxu0
      %v951 = vadd.f32 0.0, %v950
      %v952 = vpop.f32.mrb[0].mxu0
      %v953 = vpop.f32.mrb[0].mxu0
      %v954 = vadd.f32 0.0, %v953
      %v955 = vpop.f32.mrb[0].mxu0
      %956 = vmatprep.mubr.bf16.mxu0 0
      %957 = vmatmul.mubr.bf16.gmra.mrb[0].mxu0 %v905
      %v958 = vpop.f32.mrb[0].mxu0
      %v959 = vadd.f32 0.0, %v958
      %v960 = vpop.f32.mrb[0].mxu0
      %v961 = vpop.f32.mrb[0].mxu0
      %v962 = vadd.f32 0.0, %v961
      %v963 = vpop.f32.mrb[0].mxu0
      %964 = vmatprep.mubr.bf16.mxu0 0
      %965 = vmatmul.mubr.bf16.gmra.mrb[0].mxu0 %v908
      %v966 = vpop.f32.mrb[0].mxu0
      %v967 = vadd.f32 0.0, %v966
      %v968 = vpop.f32.mrb[0].mxu0
      %v969 = vpop.f32.mrb[0].mxu0
      %v970 = vadd.f32 0.0, %v969
      %v971 = vpop.f32.mrb[0].mxu0
      %972 = vmatprep.mubr.bf16.mxu0 0
      %973 = vmatmul.mubr.bf16.gmra.mrb[0].mxu0 %v911
      %v974 = vpop.f32.mrb[0].mxu0
      %v975 = vadd.f32 0.0, %v974
      %v976 = vpop.f32.mrb[0].mxu0
      %v977 = vpop.f32.mrb[0].mxu0
      %v978 = vadd.f32 0.0, %v977
      %v979 = vpop.f32.mrb[0].mxu0
      %980 = vdwg.mxu0
      %v981 = vadd.f32 %v863, %v951
      %v982 = vadd.f32 %v864, %v954
      %v983 = vadd.f32 %v865, %v959
      %v984 = vadd.f32 %v866, %v962
      %v985 = vadd.f32 %v867, %v967
      %v986 = vadd.f32 %v868, %v970
      %v987 = vadd.f32 %v869, %v975
      %v988 = vadd.f32 %v870, %v978
      %v989 = vld [vmem:[%s182 + $0x4] sm:$0xf]
      %v990 = vld [vmem:[%s182 + $0x8] sm:$0xf]
      %v991 = vld [vmem:[%s182 + $0xc] sm:$0xf]
      %v992 = vld [vmem:[%s182 + $0x10] sm:$0xf]
      %v993 = vld [vmem:[%s182 + $0x14] sm:$0xf]
      %v994 = vld [vmem:[%s182 + $0x18] sm:$0xf]
      %v995 = vld [vmem:[%s182 + $0x1c] sm:$0xf]
      %v996 = vld [vmem:[%s182 + $0x20] sm:$0xf]
      %s997 = scalar_lea.vmem %s1, 14
      %v998 = vld [vmem:[%s997] sm:$0x3]
      %v1007 = vunpack.c.l.b16 %v989
      %v1008 = vunpack.c.l.b16 %v990
      %v1009 = vunpack.c.l.b16 %v991
      %v1010 = vunpack.c.l.b16 %v992
      %v1011 = vunpack.c.l.b16 %v993
      %v1012 = vunpack.c.l.b16 %v994
      %v1013 = vunpack.c.l.b16 %v995
      %v1014 = vunpack.c.l.b16 %v996
      %v1015 = vpack.c.b16 %v1008, %v1007
      %v1016 = vpack.c.b16 %v1010, %v1009
      %v1017 = vpack.c.b16 %v1012, %v1011
      %v1018 = vpack.c.b16 %v1014, %v1013
      %v1020 = vsel %vm213, %v1015, 0
      %v1023 = vsel %vm213, %v1016, 0
      %v1026 = vsel %vm213, %v1017, 0
      %v1029 = vsel %vm213, %v1018, 0
      %v1032 = vsel %vm226, %v998, 0
      %1034 = vmatprep.subr.bf16.mxu0 0
      %1035 = vmatpush1.bf16.msra.mxu0 %v1032
      %1036 = vmatprep.subr.bf16.mxu0 0
      %1037 = vmatpush1.bf16.msra.mxu0 0
      %1038 = vmatprep.subr.bf16.mxu0 0
      %1039 = vmatpush1.bf16.msra.mxu0 0
      %1040 = vmatprep.subr.bf16.mxu0 0
      %1041 = vmatpush1.bf16.msra.mxu0 0
      %1042 = vmatprep.subr.bf16.mxu0 0
      %1043 = vmatpush1.bf16.msra.mxu0 0
      %1044 = vmatprep.subr.bf16.mxu0 0
      %1045 = vmatpush1.bf16.msra.mxu0 0
      %1046 = vmatprep.subr.bf16.mxu0 0
      %1047 = vmatpush1.bf16.msra.mxu0 0
      %1048 = vmatprep.subr.bf16.mxu0 0
      %1049 = vmatpush1.bf16.msra.mxu0 0
      %1050 = vmatprep.subr.bf16.mxu0 0
      %1051 = vmatpush1.bf16.msra.mxu0 0
      %1052 = vmatprep.subr.bf16.mxu0 0
      %1053 = vmatpush1.bf16.msra.mxu0 0
      %1054 = vmatprep.subr.bf16.mxu0 0
      %1055 = vmatpush1.bf16.msra.mxu0 0
      %1056 = vmatprep.subr.bf16.mxu0 0
      %1057 = vmatpush1.bf16.msra.mxu0 0
      %1058 = vmatprep.subr.bf16.mxu0 0
      %1059 = vmatpush1.bf16.msra.mxu0 0
      %1060 = vmatprep.subr.bf16.mxu0 0
      %1061 = vmatpush1.bf16.msra.mxu0 0
      %1062 = vmatprep.subr.bf16.mxu0 0
      %1063 = vmatpush1.bf16.msra.mxu0 0
      %1064 = vmatprep.subr.bf16.mxu0 0
      %1065 = vmatpush1.bf16.msra.mxu0 0
      %1066 = vmatprep.mubr.bf16.mxu0 0
      %1067 = vmatmul.mubr.bf16.gmra.mrb[0].mxu0 %v1020
      %v1068 = vpop.f32.mrb[0].mxu0
      %v1069 = vadd.f32 0.0, %v1068
      %v1070 = vpop.f32.mrb[0].mxu0
      %v1071 = vpop.f32.mrb[0].mxu0
      %v1072 = vadd.f32 0.0, %v1071
      %v1073 = vpop.f32.mrb[0].mxu0
      %1074 = vmatprep.mubr.bf16.mxu0 0
      %1075 = vmatmul.mubr.bf16.gmra.mrb[0].mxu0 %v1023
      %v1076 = vpop.f32.mrb[0].mxu0
      %v1077 = vadd.f32 0.0, %v1076
      %v1078 = vpop.f32.mrb[0].mxu0
      %v1079 = vpop.f32.mrb[0].mxu0
      %v1080 = vadd.f32 0.0, %v1079
      %v1081 = vpop.f32.mrb[0].mxu0
      %1082 = vmatprep.mubr.bf16.mxu0 0
      %1083 = vmatmul.mubr.bf16.gmra.mrb[0].mxu0 %v1026
      %v1084 = vpop.f32.mrb[0].mxu0
      %v1085 = vadd.f32 0.0, %v1084
      %v1086 = vpop.f32.mrb[0].mxu0
      %v1087 = vpop.f32.mrb[0].mxu0
      %v1088 = vadd.f32 0.0, %v1087
      %v1089 = vpop.f32.mrb[0].mxu0
      %1090 = vmatprep.mubr.bf16.mxu0 0
      %1091 = vmatmul.mubr.bf16.gmra.mrb[0].mxu0 %v1029
      %v1092 = vpop.f32.mrb[0].mxu0
      %v1093 = vadd.f32 0.0, %v1092
      %v1094 = vpop.f32.mrb[0].mxu0
      %v1095 = vpop.f32.mrb[0].mxu0
      %v1096 = vadd.f32 0.0, %v1095
      %v1097 = vpop.f32.mrb[0].mxu0
      %1098 = vdwg.mxu0
      %v1099 = vadd.f32 %v981, %v1069
      %v1100 = vadd.f32 %v982, %v1072
      %v1101 = vadd.f32 %v983, %v1077
      %v1102 = vadd.f32 %v984, %v1080
      %v1103 = vadd.f32 %v985, %v1085
      %v1104 = vadd.f32 %v986, %v1088
      %v1105 = vadd.f32 %v987, %v1093
      %v1106 = vadd.f32 %v988, %v1096
      %v1107 = vld [vmem:[%s395 + $0x4] sm:$0xf]
      %v1108 = vld [vmem:[%s395 + $0x8] sm:$0xf]
      %v1109 = vld [vmem:[%s395 + $0xc] sm:$0xf]
      %v1110 = vld [vmem:[%s395 + $0x10] sm:$0xf]
      %v1111 = vld [vmem:[%s395 + $0x14] sm:$0xf]
      %v1112 = vld [vmem:[%s395 + $0x18] sm:$0xf]
      %v1113 = vld [vmem:[%s395 + $0x1c] sm:$0xf]
      %v1114 = vld [vmem:[%s395 + $0x20] sm:$0xf]
      %s1115 = scalar_lea.vmem %s1, 16
      %v1116 = vld [vmem:[%s1115] sm:$0x3]
      %v1125 = vunpack.c.l.b16 %v1107
      %v1126 = vunpack.c.l.b16 %v1108
      %v1127 = vunpack.c.l.b16 %v1109
      %v1128 = vunpack.c.l.b16 %v1110
      %v1129 = vunpack.c.l.b16 %v1111
      %v1130 = vunpack.c.l.b16 %v1112
      %v1131 = vunpack.c.l.b16 %v1113
      %v1132 = vunpack.c.l.b16 %v1114
      %v1133 = vpack.c.b16 %v1126, %v1125
      %v1134 = vpack.c.b16 %v1128, %v1127
      %v1135 = vpack.c.b16 %v1130, %v1129
      %v1136 = vpack.c.b16 %v1132, %v1131
      %v1138 = vsel %vm213, %v1133, 0
      %v1141 = vsel %vm213, %v1134, 0
      %v1144 = vsel %vm213, %v1135, 0
      %v1147 = vsel %vm213, %v1136, 0
      %v1150 = vsel %vm226, %v1116, 0
      %1152 = vmatprep.subr.bf16.mxu0 0
      %1153 = vmatpush1.bf16.msra.mxu0 %v1150
      %1154 = vmatprep.subr.bf16.mxu0 0
      %1155 = vmatpush1.bf16.msra.mxu0 0
      %1156 = vmatprep.subr.bf16.mxu0 0
      %1157 = vmatpush1.bf16.msra.mxu0 0
      %1158 = vmatprep.subr.bf16.mxu0 0
      %1159 = vmatpush1.bf16.msra.mxu0 0
      %1160 = vmatprep.subr.bf16.mxu0 0
      %1161 = vmatpush1.bf16.msra.mxu0 0
      %1162 = vmatprep.subr.bf16.mxu0 0
      %1163 = vmatpush1.bf16.msra.mxu0 0
      %1164 = vmatprep.subr.bf16.mxu0 0
      %1165 = vmatpush1.bf16.msra.mxu0 0
      %1166 = vmatprep.subr.bf16.mxu0 0
      %1167 = vmatpush1.bf16.msra.mxu0 0
      %1168 = vmatprep.subr.bf16.mxu0 0
      %1169 = vmatpush1.bf16.msra.mxu0 0
      %1170 = vmatprep.subr.bf16.mxu0 0
      %1171 = vmatpush1.bf16.msra.mxu0 0
      %1172 = vmatprep.subr.bf16.mxu0 0
      %1173 = vmatpush1.bf16.msra.mxu0 0
      %1174 = vmatprep.subr.bf16.mxu0 0
      %1175 = vmatpush1.bf16.msra.mxu0 0
      %1176 = vmatprep.subr.bf16.mxu0 0
      %1177 = vmatpush1.bf16.msra.mxu0 0
      %1178 = vmatprep.subr.bf16.mxu0 0
      %1179 = vmatpush1.bf16.msra.mxu0 0
      %1180 = vmatprep.subr.bf16.mxu0 0
      %1181 = vmatpush1.bf16.msra.mxu0 0
      %1182 = vmatprep.subr.bf16.mxu0 0
      %1183 = vmatpush1.bf16.msra.mxu0 0
      %1184 = vmatprep.mubr.bf16.mxu0 0
      %1185 = vmatmul.mubr.bf16.gmra.mrb[0].mxu0 %v1138
      %v1186 = vpop.f32.mrb[0].mxu0
      %v1187 = vadd.f32 0.0, %v1186
      %v1188 = vpop.f32.mrb[0].mxu0
      %v1189 = vpop.f32.mrb[0].mxu0
      %v1190 = vadd.f32 0.0, %v1189
      %v1191 = vpop.f32.mrb[0].mxu0
      %1192 = vmatprep.mubr.bf16.mxu0 0
      %1193 = vmatmul.mubr.bf16.gmra.mrb[0].mxu0 %v1141
      %v1194 = vpop.f32.mrb[0].mxu0
      %v1195 = vadd.f32 0.0, %v1194
      %v1196 = vpop.f32.mrb[0].mxu0
      %v1197 = vpop.f32.mrb[0].mxu0
      %v1198 = vadd.f32 0.0, %v1197
      %v1199 = vpop.f32.mrb[0].mxu0
      %1200 = vmatprep.mubr.bf16.mxu0 0
      %1201 = vmatmul.mubr.bf16.gmra.mrb[0].mxu0 %v1144
      %v1202 = vpop.f32.mrb[0].mxu0
      %v1203 = vadd.f32 0.0, %v1202
      %v1204 = vpop.f32.mrb[0].mxu0
      %v1205 = vpop.f32.mrb[0].mxu0
      %v1206 = vadd.f32 0.0, %v1205
      %v1207 = vpop.f32.mrb[0].mxu0
      %1208 = vmatprep.mubr.bf16.mxu0 0
      %1209 = vmatmul.mubr.bf16.gmra.mrb[0].mxu0 %v1147
      %v1210 = vpop.f32.mrb[0].mxu0
      %v1211 = vadd.f32 0.0, %v1210
      %v1212 = vpop.f32.mrb[0].mxu0
      %v1213 = vpop.f32.mrb[0].mxu0
      %v1214 = vadd.f32 0.0, %v1213
      %v1215 = vpop.f32.mrb[0].mxu0
      %1216 = vdwg.mxu0
      %v1217 = vadd.f32 %v1099, %v1187
      %v1218 = vadd.f32 %v1100, %v1190
      %v1219 = vadd.f32 %v1101, %v1195
      %v1220 = vadd.f32 %v1102, %v1198
      %v1221 = vadd.f32 %v1103, %v1203
      %v1222 = vadd.f32 %v1104, %v1206
      %v1223 = vadd.f32 %v1105, %v1211
      %v1224 = vadd.f32 %v1106, %v1214
      %v1225 = vld [vmem:[%s2] sm:$0x1]
      %v1227 = vlaneseq
      %v1228 = vshrl.u32 %v1227, 7
      %v1229 = vsub.s32 0, %v1228
      %v1230 = vrot.slane %v1225, %v1229
      %v1232 = vadd.f32 %v1217, %v1230
      %v1233 = vadd.f32 %v1218, %v1230
      %v1234 = vadd.f32 %v1219, %v1230
      %v1235 = vadd.f32 %v1220, %v1230
      %v1236 = vadd.f32 %v1221, %v1230
      %v1237 = vadd.f32 %v1222, %v1230
      %v1238 = vadd.f32 %v1223, %v1230
      %v1239 = vadd.f32 %v1224, %v1230
      %v1240 = vmax.f32 %v1232, 0.0
      %v1241 = vmax.f32 %v1233, 0.0
      %v1242 = vmax.f32 %v1234, 0.0
      %v1243 = vmax.f32 %v1235, 0.0
      %v1244 = vmax.f32 %v1236, 0.0
      %v1245 = vmax.f32 %v1237, 0.0
      %v1246 = vmax.f32 %v1238, 0.0
      %v1247 = vmax.f32 %v1239, 0.0
      %v1248 = vpack.c.bf16 %v1241, %v1240
      %v1249 = vpack.c.bf16 %v1243, %v1242
      %v1250 = vpack.c.bf16 %v1245, %v1244
      %v1251 = vpack.c.bf16 %v1247, %v1246
      %v1256 = vunpack.c.l.b16 %v1248
      %v1257 = vunpack.c.h.b16 %v1248
      %v1258 = vunpack.c.l.b16 %v1249
      %v1259 = vunpack.c.h.b16 %v1249
      %v1260 = vunpack.c.l.b16 %v1250
      %v1261 = vunpack.c.h.b16 %v1250
      %v1262 = vunpack.c.l.b16 %v1251
      %v1263 = vunpack.c.h.b16 %v1251
      %v1264 = vpack.c.b16 %v1256, %v1256
      %v1265 = vpack.c.b16 %v1257, %v1257
      %v1266 = vpack.c.b16 %v1258, %v1258
      %v1267 = vpack.c.b16 %v1259, %v1259
      %v1268 = vpack.c.b16 %v1260, %v1260
      %v1269 = vpack.c.b16 %v1261, %v1261
      %v1270 = vpack.c.b16 %v1262, %v1262
      %v1271 = vpack.c.b16 %v1263, %v1263
      %1280 = vst [vmem:[%s170] sm:$0xf] %v1264
      %1281 = vst [vmem:[%s170 + $0x4] sm:$0xf] %v1265
      %1282 = vst [vmem:[%s170 + $0x8] sm:$0xf] %v1266
      %1283 = vst [vmem:[%s170 + $0xc] sm:$0xf] %v1267
      %1284 = vst [vmem:[%s170 + $0x10] sm:$0xf] %v1268
      %1285 = vst [vmem:[%s170 + $0x14] sm:$0xf] %v1269
      %1286 = vst [vmem:[%s170 + $0x18] sm:$0xf] %v1270
      %1287 = vst [vmem:[%s170 + $0x1c] sm:$0xf] %v1271
      %s1288 = smul.u32 8, %s14
      %p1289 = scmp.lt.s32.totalorder %s1288, 15
      %s1290 = scalar_select %p1289, %s1288, 15
      %s1291 = smul.addr %s1290, 4
      %s1292 = scalar_lea.vmem %s3, %s1291
      // Predicated region
      $region33: #{basic_block_forward.2} parent=31 // pred_check
        %p1293 = pneg %p100
      $region34: #{basic_block_forward.2} parent=31 // pred_check_branch
        %1295 = sbr.rel (%p1293) target = $region36
      $region35: #{basic_block_forward.2} parent=31 // pred_region
        %s1296 = smul.u32 8, %s14
      $region36: #{basic_block_forward.2} parent=31 // pred_fallthru
        _
    $region32: #{basic_block_forward.2} parent=5 // pred_fallthru
      _
    %p1297 = scmp.le.s32.totalorder 2, %s9
    // Predicated region
    $region37: #{basic_block_forward.2} parent=5 // pred_check
      %p1298 = pneg %p1297
    $region38: #{basic_block_forward.2} parent=5 // pred_check_branch
      %1300 = sbr.rel (%p1298) target = $region40
    $region39: #{basic_block_forward.2} parent=5 // pred_region
      %s1301 = ssub.s32 %s9, 2
      // Predicated region
      $region41: #{basic_block_forward.2} parent=39 // pred_check
        %p1302 = pneg %p106
      $region42: #{basic_block_forward.2} parent=39 // pred_check_branch
        %1304 = sbr.rel (%p1302) target = $region44
      $region43: #{basic_block_forward.2} parent=39 // pred_region
        %s1305 = smul.u32 8, %s15
        %p1306 = scmp.lt.s32.totalorder %s1305, 15
        %s1307 = scalar_select %p1306, %s1305, 15
        %s1308 = smul.addr %s1307, 4
        %s1309 = scalar_lea.vmem %s3, %s1308
      $region44: #{basic_block_forward.2} parent=39 // pred_fallthru
        _
    $region40: #{basic_block_forward.2} parent=5 // pred_fallthru
      _
  $region6: #{basic_block_forward.2} parent=0 // loop_footer
    %s13 = sadd.s32 1, %s9
  $region7: #{basic_block_forward.2} parent=0 // loop_footer_branch
    %8 = sbr.rel target = $region3
  $region8: #{basic_block_forward.2} parent=0 // loop_exit
    _

// kernel: basic_block_forward.3
$region0: #{basic_block_forward.3}
  #allocation0 [shape = 'u32[]', space=smem, size = 0x4, offset = 0x4, fixed_abs, tag = 'smem constant byte address 0x4 - core index']
  #allocation1 [shape = 'u32[144,128]{1,0:T(1,128)}', space=vmem, size = 0x12000, scoped, tag = 'internal scratch']
  %s0 = inlined_call_operand.vmem [shape: bf16[2,3,80,8], index: 0, kind: input, shape index: {}]
  %s1 = inlined_call_operand.vmem [shape: bf16[9,8,128], index: 1, kind: input, shape index: {}]
  %s2 = inlined_call_operand.vmem [shape: f32[1,128], index: 2, kind: input, shape index: {}]
  %s3 = inlined_call_operand.vmem [shape: bf16[128,4], index: 3, kind: input, shape index: {}]
  %s4 = inlined_call_operand.vmem [shape: bf16[4,128], index: 4, kind: input, shape index: {}]
  %s5 = inlined_call_operand.vmem [shape: f32[128,128], index: 5, kind: output, shape index: {}]
  %s6 = sld [smem:[#allocation0]]
  $region53: #{basic_block_forward.3} parent=0
    _
  %s8 = ssub.s32 1, %s6
  %s9 = scalar_select 0, %s8, %s6
  loop: start=0, step=1, limit=4
  $region2: #{basic_block_forward.3} parent=0 // loop_pre_header
    _
  $region3: #{basic_block_forward.3} parent=0 // loop_header
    %s11 = sphi 0, %s15
    %p12 = scmp.ge.s32.totalorder %s11, 4
    %s21 = sphi 0, %s23
    %s24 = sphi 0, %s21
    %s25 = sphi 0, %s24
    %s41 = sphi 0, %s25
    %s45 = sphi 0, %s45
    %s47 = sphi 0, %s45
    %s48 = sphi 0, %s47
    %s62 = sphi 0, %s48
    %s66 = sphi 0, %s66
    %s68 = sphi 0, %s66
    %s69 = sphi 0, %s68
    %s83 = sphi 0, %s69
    %s89 = sphi 0, %s91
    %s92 = sphi 0, %s89
    %s93 = sphi 0, %s92
    %s109 = sphi 0, %s93
    %s113 = sphi 0, %s113
    %s115 = sphi 0, %s113
    %s116 = sphi 0, %s115
    %s130 = sphi 0, %s116
    %s136 = sphi 0, %s138
    %s139 = sphi 0, %s136
    %s140 = sphi 0, %s139
    %s156 = sphi 0, %s140
  $region4: #{basic_block_forward.3} parent=0 // loop_header_branch
    %14 = sbr.rel (%p12) target = $region8
  $region5: #{basic_block_forward.3} parent=0 // loop_body
    %s16 = ssub.s32 %s11, 1
    %s17 = ssub.s32 %s11, 2
    %s18 = sadd.s32 %s11, 1
    %s19 = ssub.s32 %s11, %s18
    %p20 = scmp.eq.s32.totalorder %s19, 0
    %s22 = sadd.s32 %s21, 1
    %s23 = scalar_select %p20, %s21, %s22
    %p26 = pneg %p20
    %p27 = scmp.eq.s32.totalorder %s11, 1
    %p28 = por %p26, %p27
    %p29 = scmp.ne.s32.totalorder %s21, %s24
    %p30 = scmp.eq.s32.totalorder %s11, 0
    %p31 = por %p29, %p30
    %p32 = scmp.ne.s32.totalorder %s21, %s24
    %p33 = scmp.eq.s32.totalorder %s16, 1
    %p34 = por %p32, %p33
    %p35 = scmp.ne.s32.totalorder %s24, %s25
    %p36 = scmp.eq.s32.totalorder %s16, 0
    %p37 = por %p35, %p36
    %p38 = scmp.ne.s32.totalorder %s24, %s25
    %p39 = scmp.eq.s32.totalorder %s17, 1
    %p40 = por %p38, %p39
    %p42 = scmp.ne.s32.totalorder %s25, %s41
    %p43 = scmp.eq.s32.totalorder %s17, 0
    %p44 = por %p42, %p43
    %s46 = sadd.s32 %s45, 1
    %p49 = scmp.eq.s32.totalorder %s11, 1
    %p50 = scmp.ne.s32.totalorder %s45, %s47
    %p51 = scmp.eq.s32.totalorder %s11, 0
    %p52 = por %p50, %p51
    %p53 = scmp.ne.s32.totalorder %s45, %s47
    %p54 = scmp.eq.s32.totalorder %s16, 1
    %p55 = por %p53, %p54
    %p56 = scmp.ne.s32.totalorder %s47, %s48
    %p57 = scmp.eq.s32.totalorder %s16, 0
    %p58 = por %p56, %p57
    %p59 = scmp.ne.s32.totalorder %s47, %s48
    %p60 = scmp.eq.s32.totalorder %s17, 1
    %p61 = por %p59, %p60
    %p63 = scmp.ne.s32.totalorder %s48, %s62
    %p64 = scmp.eq.s32.totalorder %s17, 0
    %p65 = por %p63, %p64
    %s67 = sadd.s32 %s66, 1
    %p70 = scmp.eq.s32.totalorder %s11, 1
    %p71 = scmp.ne.s32.totalorder %s66, %s68
    %p72 = scmp.eq.s32.totalorder %s11, 0
    %p73 = por %p71, %p72
    %p74 = scmp.ne.s32.totalorder %s66, %s68
    %p75 = scmp.eq.s32.totalorder %s16, 1
    %p76 = por %p74, %p75
    %p77 = scmp.ne.s32.totalorder %s68, %s69
    %p78 = scmp.eq.s32.totalorder %s16, 0
    %p79 = por %p77, %p78
    %p80 = scmp.ne.s32.totalorder %s68, %s69
    %p81 = scmp.eq.s32.totalorder %s17, 1
    %p82 = por %p80, %p81
    %p84 = scmp.ne.s32.totalorder %s69, %s83
    %p85 = scmp.eq.s32.totalorder %s17, 0
    %p86 = por %p84, %p85
    %s87 = ssub.s32 %s11, %s18
    %p88 = scmp.eq.s32.totalorder %s87, 0
    %s90 = sadd.s32 %s89, 1
    %s91 = scalar_select %p88, %s89, %s90
    %p94 = pneg %p88
    %p95 = scmp.eq.s32.totalorder %s11, 1
    %p96 = por %p94, %p95
    %p97 = scmp.ne.s32.totalorder %s89, %s92
    %p98 = scmp.eq.s32.totalorder %s11, 0
    %p99 = por %p97, %p98
    %p100 = scmp.ne.s32.totalorder %s89, %s92
    %p101 = scmp.eq.s32.totalorder %s16, 1
    %p102 = por %p100, %p101
    %p103 = scmp.ne.s32.totalorder %s92, %s93
    %p104 = scmp.eq.s32.totalorder %s16, 0
    %p105 = por %p103, %p104
    %p106 = scmp.ne.s32.totalorder %s92, %s93
    %p107 = scmp.eq.s32.totalorder %s17, 1
    %p108 = por %p106, %p107
    %p110 = scmp.ne.s32.totalorder %s93, %s109
    %p111 = scmp.eq.s32.totalorder %s17, 0
    %p112 = por %p110, %p111
    %s114 = sadd.s32 %s113, 1
    %p117 = scmp.eq.s32.totalorder %s11, 1
    %p118 = scmp.ne.s32.totalorder %s113, %s115
    %p119 = scmp.eq.s32.totalorder %s11, 0
    %p120 = por %p118, %p119
    %p121 = scmp.ne.s32.totalorder %s113, %s115
    %p122 = scmp.eq.s32.totalorder %s16, 1
    %p123 = por %p121, %p122
    %p124 = scmp.ne.s32.totalorder %s115, %s116
    %p125 = scmp.eq.s32.totalorder %s16, 0
    %p126 = por %p124, %p125
    %p127 = scmp.ne.s32.totalorder %s115, %s116
    %p128 = scmp.eq.s32.totalorder %s17, 1
    %p129 = por %p127, %p128
    %p131 = scmp.ne.s32.totalorder %s116, %s130
    %p132 = scmp.eq.s32.totalorder %s17, 0
    %p133 = por %p131, %p132
    %s134 = ssub.s32 %s11, %s18
    %p135 = scmp.eq.s32.totalorder %s134, 0
    %s137 = sadd.s32 %s136, 1
    %s138 = scalar_select %p135, %s136, %s137
    %p141 = pneg %p135
    %p142 = scmp.eq.s32.totalorder %s11, 1
    %p143 = por %p141, %p142
    %p144 = scmp.ne.s32.totalorder %s136, %s139
    %p145 = scmp.eq.s32.totalorder %s11, 0
    %p146 = por %p144, %p145
    %p147 = scmp.ne.s32.totalorder %s136, %s139
    %p148 = scmp.eq.s32.totalorder %s16, 1
    %p149 = por %p147, %p148
    %p150 = scmp.ne.s32.totalorder %s139, %s140
    %p151 = scmp.eq.s32.totalorder %s16, 0
    %p152 = por %p150, %p151
    %p153 = scmp.ne.s32.totalorder %s139, %s140
    %p154 = scmp.eq.s32.totalorder %s17, 1
    %p155 = por %p153, %p154
    %p157 = scmp.ne.s32.totalorder %s140, %s156
    %p158 = scmp.eq.s32.totalorder %s17, 0
    %p159 = por %p157, %p158
    %p160 = scmp.le.s32.totalorder 1, %s11
    %p161 = scmp.lt.s32.totalorder %s11, 3
    %p162 = pnand %p160, %p161
    %p163 = pneg %p162
    // Predicated region
    $region9: #{basic_block_forward.3} parent=5 // pred_check
      _
    $region10: #{basic_block_forward.3} parent=5 // pred_check_branch
      %165 = sbr.rel (%p162) target = $region12
    $region11: #{basic_block_forward.3} parent=5 // pred_region
      %s166 = ssub.s32 %s11, 1
      // Predicated region
      $region13: #{basic_block_forward.3} parent=11 // pred_check
        %p167 = pneg %p58
      $region14: #{basic_block_forward.3} parent=11 // pred_check_branch
        %169 = sbr.rel (%p167) target = $region16
      $region15: #{basic_block_forward.3} parent=11 // pred_region
        _
      $region16: #{basic_block_forward.3} parent=11 // pred_fallthru
        _
      // Predicated region
      $region17: #{basic_block_forward.3} parent=11 // pred_check
        %p170 = pneg %p79
      $region18: #{basic_block_forward.3} parent=11 // pred_check_branch
        %172 = sbr.rel (%p170) target = $region20
      $region19: #{basic_block_forward.3} parent=11 // pred_region
        _
      $region20: #{basic_block_forward.3} parent=11 // pred_fallthru
        _
      // Predicated region
      $region21: #{basic_block_forward.3} parent=11 // pred_check
        %p173 = pneg %p126
      $region22: #{basic_block_forward.3} parent=11 // pred_check_branch
        %175 = sbr.rel (%p173) target = $region24
      $region23: #{basic_block_forward.3} parent=11 // pred_region
        _
      $region24: #{basic_block_forward.3} parent=11 // pred_fallthru
        _
    $region12: #{basic_block_forward.3} parent=5 // pred_fallthru
      _
    %p176 = scmp.lt.s32.totalorder %s11, 2
    // Predicated region
    $region25: #{basic_block_forward.3} parent=5 // pred_check
      %p177 = pneg %p176
    $region26: #{basic_block_forward.3} parent=5 // pred_check_branch
      %179 = sbr.rel (%p177) target = $region28
    $region27: #{basic_block_forward.3} parent=5 // pred_region
      // Predicated region
      $region29: #{basic_block_forward.3} parent=27 // pred_check
        %p180 = pneg %p31
      $region30: #{basic_block_forward.3} parent=27 // pred_check_branch
        %182 = sbr.rel (%p180) target = $region32
      $region31: #{basic_block_forward.3} parent=27 // pred_region
        %p183 = scmp.lt.s32.totalorder %s11, 1
        %s184 = scalar_select %p183, %s11, 1
        %s185 = smul.addr %s184, 30
        %s186 = smul.addr %s185, 4
        %s187 = scalar_lea.vmem %s0, %s186
      $region32: #{basic_block_forward.3} parent=27 // pred_fallthru
        _
      // Predicated region
      $region33: #{basic_block_forward.3} parent=27 // pred_check
        %p188 = pneg %p99
      $region34: #{basic_block_forward.3} parent=27 // pred_check_branch
        %190 = sbr.rel (%p188) target = $region36
      $region35: #{basic_block_forward.3} parent=27 // pred_region
        %s191 = smul.u32 8, %s11
        %p192 = scmp.lt.s32.totalorder %s191, 15
        %s193 = scalar_select %p192, %s191, 15
        %s194 = smul.addr %s193, 4
        %s195 = scalar_lea.vmem %s3, %s194
        %s196 = smul.u32 8, %s11
      $region36: #{basic_block_forward.3} parent=27 // pred_fallthru
        _
    $region28: #{basic_block_forward.3} parent=5 // pred_fallthru
      _
    %p197 = scmp.le.s32.totalorder 1, %s11
    %p198 = scmp.lt.s32.totalorder %s11, 3
    %p199 = pnand %p197, %p198
    %p200 = pneg %p199
    // Predicated region
    $region37: #{basic_block_forward.3} parent=5 // pred_check
      _
    $region38: #{basic_block_forward.3} parent=5 // pred_check_branch
      %202 = sbr.rel (%p199) target = $region40
    $region39: #{basic_block_forward.3} parent=5 // pred_region
      %s203 = ssub.s32 %s11, 1
      %p204 = scmp.lt.s32.totalorder %s16, 1
      %s205 = scalar_select %p204, %s16, 1
      %s206 = smul.addr %s205, 30
      %s207 = smul.addr %s206, 4
      %s208 = scalar_lea.vmem %s0, %s207
      %p209 = pneg %p37
      %p210 = pneg %p34
      %p211 = pneg %p58
      %p212 = pneg %p55
      %p213 = pneg %p79
      %p214 = pneg %p76
      %s215 = smul.u32 8, %s16
      %p216 = scmp.lt.s32.totalorder %s215, 15
      %s217 = scalar_select %p216, %s215, 15
      %s218 = smul.addr %s217, 4
      %s219 = scalar_lea.vmem %s3, %s218
      %p220 = pneg %p105
      %p221 = pneg %p102
      %p222 = pneg %p126
      %p223 = pneg %p123
      %p224 = pneg %p152
      %p225 = pneg %p149
      %s226 = smul.u32 8, %s16
      %p227 = scmp.lt.s32.totalorder %s226, 15
      %s228 = scalar_select %p227, %s226, 15
      %s229 = smul.addr %s228, 8
      %s230 = scalar_lea.vmem %s5, %s229
      %p231 = scmp.lt.s32.totalorder %s16, 1
      %s232 = scalar_select %p231, %s16, 1
      %s233 = smul.addr %s232, 30
      %s234 = smul.addr %s233, 4
      %s235 = scalar_lea.vmem %s0, %s234
      %s236 = smul.u32 8, %s16
      %p237 = scmp.lt.s32.totalorder %s236, 15
      %s238 = scalar_select %p237, %s236, 15
      %s239 = smul.addr %s238, 4
      %s240 = scalar_lea.vmem %s3, %s239
      %s241 = smul.u32 8, %s16
      %s242 = smul.u32 8, %s16
      %p243 = scmp.lt.s32.totalorder %s242, 15
      %s244 = scalar_select %p243, %s242, 15
      %s245 = smul.addr %s244, 8
      %s246 = scalar_lea.vmem %s5, %s245
      %s247 = smul.u32 8, %s16
      %v249 = vld [vmem:[%s235] sm:$0xf]
      %v250 = vld [vmem:[%s235 + $0x4] sm:$0xf]
      %v251 = vld [vmem:[%s235 + $0x8] sm:$0xf]
      %v252 = vld [vmem:[%s235 + $0xc] sm:$0xf]
      %v253 = vld [vmem:[%s235 + $0x10] sm:$0xf]
      %v254 = vld [vmem:[%s235 + $0x14] sm:$0xf]
      %v255 = vld [vmem:[%s235 + $0x18] sm:$0xf]
      %v256 = vld [vmem:[%s235 + $0x1c] sm:$0xf]
      %v257 = vld [vmem:[%s1] sm:$0xf]
      %s258 = scalar_lea.vmem %s235, 40
      %v259 = vld [vmem:[%s258] sm:$0xf]
      %v260 = vld [vmem:[%s258 + $0x4] sm:$0xf]
      %v261 = vld [vmem:[%s258 + $0x8] sm:$0xf]
      %v262 = vld [vmem:[%s258 + $0xc] sm:$0xf]
      %v263 = vld [vmem:[%s258 + $0x10] sm:$0xf]
      %v264 = vld [vmem:[%s258 + $0x14] sm:$0xf]
      %v265 = vld [vmem:[%s258 + $0x18] sm:$0xf]
      %v266 = vld [vmem:[%s258 + $0x1c] sm:$0xf]
      %s267 = scalar_lea.vmem %s1, 4
      %v268 = vld [vmem:[%s267] sm:$0xf]
      %v277 = vunpack.c.l.b16 %v259
      %v278 = vunpack.c.l.b16 %v260
      %v279 = vunpack.c.l.b16 %v261
      %v280 = vunpack.c.l.b16 %v262
      %v281 = vunpack.c.l.b16 %v263
      %v282 = vunpack.c.l.b16 %v264
      %v283 = vunpack.c.l.b16 %v265
      %v284 = vunpack.c.l.b16 %v266
      %v285 = vpack.c.b16 %v278, %v277
      %v286 = vpack.c.b16 %v280, %v279
      %v287 = vpack.c.b16 %v282, %v281
      %v288 = vpack.c.b16 %v284, %v283
      %vm289 = vcmask 64512
      %v291 = vsel %vm289, %v285, 0
      %v294 = vsel %vm289, %v286, 0
      %v297 = vsel %vm289, %v287, 0
      %v300 = vsel %vm289, %v288, 0
      %vm302 = vcmask 1043456
      %v304 = vsel %vm302, %v268, 0
      %306 = vmatprep.subr.bf16.mxu0 0
      %307 = vmatpush1.bf16.msra.mxu0 %v304
      %308 = vmatprep.subr.bf16.mxu0 0
      %309 = vmatpush1.bf16.msra.mxu0 0
      %310 = vmatprep.subr.bf16.mxu0 0
      %311 = vmatpush1.bf16.msra.mxu0 0
      %312 = vmatprep.subr.bf16.mxu0 0
      %313 = vmatpush1.bf16.msra.mxu0 0
      %314 = vmatprep.subr.bf16.mxu0 0
      %315 = vmatpush1.bf16.msra.mxu0 0
      %316 = vmatprep.subr.bf16.mxu0 0
      %317 = vmatpush1.bf16.msra.mxu0 0
      %318 = vmatprep.subr.bf16.mxu0 0
      %319 = vmatpush1.bf16.msra.mxu0 0
      %320 = vmatprep.subr.bf16.mxu0 0
      %321 = vmatpush1.bf16.msra.mxu0 0
      %322 = vmatprep.subr.bf16.mxu0 0
      %323 = vmatpush1.bf16.msra.mxu0 0
      %324 = vmatprep.subr.bf16.mxu0 0
      %325 = vmatpush1.bf16.msra.mxu0 0
      %326 = vmatprep.subr.bf16.mxu0 0
      %327 = vmatpush1.bf16.msra.mxu0 0
      %328 = vmatprep.subr.bf16.mxu0 0
      %329 = vmatpush1.bf16.msra.mxu0 0
      %330 = vmatprep.subr.bf16.mxu0 0
      %331 = vmatpush1.bf16.msra.mxu0 0
      %332 = vmatprep.subr.bf16.mxu0 0
      %333 = vmatpush1.bf16.msra.mxu0 0
      %334 = vmatprep.subr.bf16.mxu0 0
      %335 = vmatpush1.bf16.msra.mxu0 0
      %336 = vmatprep.subr.bf16.mxu0 0
      %337 = vmatpush1.bf16.msra.mxu0 0
      %338 = vmatprep.mubr.bf16.mxu0 0
      %339 = vmatmul.mubr.bf16.gmra.mrb[0].mxu0 %v291
      %v340 = vpop.f32.mrb[0].mxu0
      %v341 = vadd.f32 0.0, %v340
      %v342 = vpop.f32.mrb[0].mxu0
      %v343 = vpop.f32.mrb[0].mxu0
      %v344 = vadd.f32 0.0, %v343
      %v345 = vpop.f32.mrb[0].mxu0
      %346 = vmatprep.mubr.bf16.mxu0 0
      %347 = vmatmul.mubr.bf16.gmra.mrb[0].mxu0 %v294
      %v348 = vpop.f32.mrb[0].mxu0
      %v349 = vadd.f32 0.0, %v348
      %v350 = vpop.f32.mrb[0].mxu0
      %v351 = vpop.f32.mrb[0].mxu0
      %v352 = vadd.f32 0.0, %v351
      %v353 = vpop.f32.mrb[0].mxu0
      %354 = vmatprep.mubr.bf16.mxu0 0
      %355 = vmatmul.mubr.bf16.gmra.mrb[0].mxu0 %v297
      %v356 = vpop.f32.mrb[0].mxu0
      %v357 = vadd.f32 0.0, %v356
      %v358 = vpop.f32.mrb[0].mxu0
      %v359 = vpop.f32.mrb[0].mxu0
      %v360 = vadd.f32 0.0, %v359
      %v361 = vpop.f32.mrb[0].mxu0
      %362 = vmatprep.mubr.bf16.mxu0 0
      %363 = vmatmul.mubr.bf16.gmra.mrb[0].mxu0 %v300
      %v364 = vpop.f32.mrb[0].mxu0
      %v365 = vadd.f32 0.0, %v364
      %v366 = vpop.f32.mrb[0].mxu0
      %v367 = vpop.f32.mrb[0].mxu0
      %v368 = vadd.f32 0.0, %v367
      %v369 = vpop.f32.mrb[0].mxu0
      %370 = vdwg.mxu0
      %v379 = vunpack.c.l.b16 %v249
      %v380 = vunpack.c.l.b16 %v250
      %v381 = vunpack.c.l.b16 %v251
      %v382 = vunpack.c.l.b16 %v252
      %v383 = vunpack.c.l.b16 %v253
      %v384 = vunpack.c.l.b16 %v254
      %v385 = vunpack.c.l.b16 %v255
      %v386 = vunpack.c.l.b16 %v256
      %v387 = vpack.c.b16 %v380, %v379
      %v388 = vpack.c.b16 %v382, %v381
      %v389 = vpack.c.b16 %v384, %v383
      %v390 = vpack.c.b16 %v386, %v385
      %v392 = vsel %vm289, %v387, 0
      %v395 = vsel %vm289, %v388, 0
      %v398 = vsel %vm289, %v389, 0
      %v401 = vsel %vm289, %v390, 0
      %v404 = vsel %vm302, %v257, 0
      %406 = vmatprep.subr.bf16.mxu0 0
      %407 = vmatpush1.bf16.msra.mxu0 %v404
      %408 = vmatprep.subr.bf16.mxu0 0
      %409 = vmatpush1.bf16.msra.mxu0 0
      %410 = vmatprep.subr.bf16.mxu0 0
      %411 = vmatpush1.bf16.msra.mxu0 0
      %412 = vmatprep.subr.bf16.mxu0 0
      %413 = vmatpush1.bf16.msra.mxu0 0
      %414 = vmatprep.subr.bf16.mxu0 0
      %415 = vmatpush1.bf16.msra.mxu0 0
      %416 = vmatprep.subr.bf16.mxu0 0
      %417 = vmatpush1.bf16.msra.mxu0 0
      %418 = vmatprep.subr.bf16.mxu0 0
      %419 = vmatpush1.bf16.msra.mxu0 0
      %420 = vmatprep.subr.bf16.mxu0 0
      %421 = vmatpush1.bf16.msra.mxu0 0
      %422 = vmatprep.subr.bf16.mxu0 0
      %423 = vmatpush1.bf16.msra.mxu0 0
      %424 = vmatprep.subr.bf16.mxu0 0
      %425 = vmatpush1.bf16.msra.mxu0 0
      %426 = vmatprep.subr.bf16.mxu0 0
      %427 = vmatpush1.bf16.msra.mxu0 0
      %428 = vmatprep.subr.bf16.mxu0 0
      %429 = vmatpush1.bf16.msra.mxu0 0
      %430 = vmatprep.subr.bf16.mxu0 0
      %431 = vmatpush1.bf16.msra.mxu0 0
      %432 = vmatprep.subr.bf16.mxu0 0
      %433 = vmatpush1.bf16.msra.mxu0 0
      %434 = vmatprep.subr.bf16.mxu0 0
      %435 = vmatpush1.bf16.msra.mxu0 0
      %436 = vmatprep.subr.bf16.mxu0 0
      %437 = vmatpush1.bf16.msra.mxu0 0
      %438 = vmatprep.mubr.bf16.mxu0 0
      %439 = vmatmul.mubr.bf16.gmra.mrb[0].mxu0 %v392
      %v440 = vpop.f32.mrb[0].mxu0
      %v441 = vadd.f32 %v341, %v440
      %v442 = vpop.f32.mrb[0].mxu0
      %v443 = vpop.f32.mrb[0].mxu0
      %v444 = vadd.f32 %v344, %v443
      %v445 = vpop.f32.mrb[0].mxu0
      %446 = vmatprep.mubr.bf16.mxu0 0
      %447 = vmatmul.mubr.bf16.gmra.mrb[0].mxu0 %v395
      %v448 = vpop.f32.mrb[0].mxu0
      %v449 = vadd.f32 %v349, %v448
      %v450 = vpop.f32.mrb[0].mxu0
      %v451 = vpop.f32.mrb[0].mxu0
      %v452 = vadd.f32 %v352, %v451
      %v453 = vpop.f32.mrb[0].mxu0
      %454 = vmatprep.mubr.bf16.mxu0 0
      %455 = vmatmul.mubr.bf16.gmra.mrb[0].mxu0 %v398
      %v456 = vpop.f32.mrb[0].mxu0
      %v457 = vadd.f32 %v357, %v456
      %v458 = vpop.f32.mrb[0].mxu0
      %v459 = vpop.f32.mrb[0].mxu0
      %v460 = vadd.f32 %v360, %v459
      %v461 = vpop.f32.mrb[0].mxu0
      %462 = vmatprep.mubr.bf16.mxu0 0
      %463 = vmatmul.mubr.bf16.gmra.mrb[0].mxu0 %v401
      %v464 = vpop.f32.mrb[0].mxu0
      %v465 = vadd.f32 %v365, %v464
      %v466 = vpop.f32.mrb[0].mxu0
      %v467 = vpop.f32.mrb[0].mxu0
      %v468 = vadd.f32 %v368, %v467
      %v469 = vpop.f32.mrb[0].mxu0
      %470 = vdwg.mxu0
      %s471 = scalar_lea.vmem %s235, 80
      %v472 = vld [vmem:[%s471] sm:$0xf]
      %v473 = vld [vmem:[%s471 + $0x4] sm:$0xf]
      %v474 = vld [vmem:[%s471 + $0x8] sm:$0xf]
      %v475 = vld [vmem:[%s471 + $0xc] sm:$0xf]
      %v476 = vld [vmem:[%s471 + $0x10] sm:$0xf]
      %v477 = vld [vmem:[%s471 + $0x14] sm:$0xf]
      %v478 = vld [vmem:[%s471 + $0x18] sm:$0xf]
      %v479 = vld [vmem:[%s471 + $0x1c] sm:$0xf]
      %s480 = scalar_lea.vmem %s1, 8
      %v481 = vld [vmem:[%s480] sm:$0xf]
      %v490 = vunpack.c.l.b16 %v472
      %v491 = vunpack.c.l.b16 %v473
      %v492 = vunpack.c.l.b16 %v474
      %v493 = vunpack.c.l.b16 %v475
      %v494 = vunpack.c.l.b16 %v476
      %v495 = vunpack.c.l.b16 %v477
      %v496 = vunpack.c.l.b16 %v478
      %v497 = vunpack.c.l.b16 %v479
      %v498 = vpack.c.b16 %v491, %v490
      %v499 = vpack.c.b16 %v493, %v492
      %v500 = vpack.c.b16 %v495, %v494
      %v501 = vpack.c.b16 %v497, %v496
      %v503 = vsel %vm289, %v498, 0
      %v506 = vsel %vm289, %v499, 0
      %v509 = vsel %vm289, %v500, 0
      %v512 = vsel %vm289, %v501, 0
      %v515 = vsel %vm302, %v481, 0
      %517 = vmatprep.subr.bf16.mxu0 0
      %518 = vmatpush1.bf16.msra.mxu0 %v515
      %519 = vmatprep.subr.bf16.mxu0 0
      %520 = vmatpush1.bf16.msra.mxu0 0
      %521 = vmatprep.subr.bf16.mxu0 0
      %522 = vmatpush1.bf16.msra.mxu0 0
      %523 = vmatprep.subr.bf16.mxu0 0
      %524 = vmatpush1.bf16.msra.mxu0 0
      %525 = vmatprep.subr.bf16.mxu0 0
      %526 = vmatpush1.bf16.msra.mxu0 0
      %527 = vmatprep.subr.bf16.mxu0 0
      %528 = vmatpush1.bf16.msra.mxu0 0
      %529 = vmatprep.subr.bf16.mxu0 0
      %530 = vmatpush1.bf16.msra.mxu0 0
      %531 = vmatprep.subr.bf16.mxu0 0
      %532 = vmatpush1.bf16.msra.mxu0 0
      %533 = vmatprep.subr.bf16.mxu0 0
      %534 = vmatpush1.bf16.msra.mxu0 0
      %535 = vmatprep.subr.bf16.mxu0 0
      %536 = vmatpush1.bf16.msra.mxu0 0
      %537 = vmatprep.subr.bf16.mxu0 0
      %538 = vmatpush1.bf16.msra.mxu0 0
      %539 = vmatprep.subr.bf16.mxu0 0
      %540 = vmatpush1.bf16.msra.mxu0 0
      %541 = vmatprep.subr.bf16.mxu0 0
      %542 = vmatpush1.bf16.msra.mxu0 0
      %543 = vmatprep.subr.bf16.mxu0 0
      %544 = vmatpush1.bf16.msra.mxu0 0
      %545 = vmatprep.subr.bf16.mxu0 0
      %546 = vmatpush1.bf16.msra.mxu0 0
      %547 = vmatprep.subr.bf16.mxu0 0
      %548 = vmatpush1.bf16.msra.mxu0 0
      %549 = vmatprep.mubr.bf16.mxu0 0
      %550 = vmatmul.mubr.bf16.gmra.mrb[0].mxu0 %v503
      %v551 = vpop.f32.mrb[0].mxu0
      %v552 = vadd.f32 0.0, %v551
      %v553 = vpop.f32.mrb[0].mxu0
      %v554 = vpop.f32.mrb[0].mxu0
      %v555 = vadd.f32 0.0, %v554
      %v556 = vpop.f32.mrb[0].mxu0
      %557 = vmatprep.mubr.bf16.mxu0 0
      %558 = vmatmul.mubr.bf16.gmra.mrb[0].mxu0 %v506
      %v559 = vpop.f32.mrb[0].mxu0
      %v560 = vadd.f32 0.0, %v559
      %v561 = vpop.f32.mrb[0].mxu0
      %v562 = vpop.f32.mrb[0].mxu0
      %v563 = vadd.f32 0.0, %v562
      %v564 = vpop.f32.mrb[0].mxu0
      %565 = vmatprep.mubr.bf16.mxu0 0
      %566 = vmatmul.mubr.bf16.gmra.mrb[0].mxu0 %v509
      %v567 = vpop.f32.mrb[0].mxu0
      %v568 = vadd.f32 0.0, %v567
      %v569 = vpop.f32.mrb[0].mxu0
      %v570 = vpop.f32.mrb[0].mxu0
      %v571 = vadd.f32 0.0, %v570
      %v572 = vpop.f32.mrb[0].mxu0
      %573 = vmatprep.mubr.bf16.mxu0 0
      %574 = vmatmul.mubr.bf16.gmra.mrb[0].mxu0 %v512
      %v575 = vpop.f32.mrb[0].mxu0
      %v576 = vadd.f32 0.0, %v575
      %v577 = vpop.f32.mrb[0].mxu0
      %v578 = vpop.f32.mrb[0].mxu0
      %v579 = vadd.f32 0.0, %v578
      %v580 = vpop.f32.mrb[0].mxu0
      %581 = vdwg.mxu0
      %v582 = vadd.f32 %v441, %v552
      %v583 = vadd.f32 %v444, %v555
      %v584 = vadd.f32 %v449, %v560
      %v585 = vadd.f32 %v452, %v563
      %v586 = vadd.f32 %v457, %v568
      %v587 = vadd.f32 %v460, %v571
      %v588 = vadd.f32 %v465, %v576
      %v589 = vadd.f32 %v468, %v579
      %v590 = vld [vmem:[%s235 + $0x4] sm:$0xf]
      %v591 = vld [vmem:[%s235 + $0x8] sm:$0xf]
      %v592 = vld [vmem:[%s235 + $0xc] sm:$0xf]
      %v593 = vld [vmem:[%s235 + $0x10] sm:$0xf]
      %v594 = vld [vmem:[%s235 + $0x14] sm:$0xf]
      %v595 = vld [vmem:[%s235 + $0x18] sm:$0xf]
      %v596 = vld [vmem:[%s235 + $0x1c] sm:$0xf]
      %v597 = vld [vmem:[%s235 + $0x20] sm:$0xf]
      %s598 = scalar_lea.vmem %s1, 12
      %v599 = vld [vmem:[%s598] sm:$0xf]
      %v608 = vunpack.c.l.b16 %v590
      %v609 = vunpack.c.l.b16 %v591
      %v610 = vunpack.c.l.b16 %v592
      %v611 = vunpack.c.l.b16 %v593
      %v612 = vunpack.c.l.b16 %v594
      %v613 = vunpack.c.l.b16 %v595
      %v614 = vunpack.c.l.b16 %v596
      %v615 = vunpack.c.l.b16 %v597
      %v616 = vpack.c.b16 %v609, %v608
      %v617 = vpack.c.b16 %v611, %v610
      %v618 = vpack.c.b16 %v613, %v612
      %v619 = vpack.c.b16 %v615, %v614
      %v621 = vsel %vm289, %v616, 0
      %v624 = vsel %vm289, %v617, 0
      %v627 = vsel %vm289, %v618, 0
      %v630 = vsel %vm289, %v619, 0
      %v633 = vsel %vm302, %v599, 0
      %635 = vmatprep.subr.bf16.mxu0 0
      %636 = vmatpush1.bf16.msra.mxu0 %v633
      %637 = vmatprep.subr.bf16.mxu0 0
      %638 = vmatpush1.bf16.msra.mxu0 0
      %639 = vmatprep.subr.bf16.mxu0 0
      %640 = vmatpush1.bf16.msra.mxu0 0
      %641 = vmatprep.subr.bf16.mxu0 0
      %642 = vmatpush1.bf16.msra.mxu0 0
      %643 = vmatprep.subr.bf16.mxu0 0
      %644 = vmatpush1.bf16.msra.mxu0 0
      %645 = vmatprep.subr.bf16.mxu0 0
      %646 = vmatpush1.bf16.msra.mxu0 0
      %647 = vmatprep.subr.bf16.mxu0 0
      %648 = vmatpush1.bf16.msra.mxu0 0
      %649 = vmatprep.subr.bf16.mxu0 0
      %650 = vmatpush1.bf16.msra.mxu0 0
      %651 = vmatprep.subr.bf16.mxu0 0
      %652 = vmatpush1.bf16.msra.mxu0 0
      %653 = vmatprep.subr.bf16.mxu0 0
      %654 = vmatpush1.bf16.msra.mxu0 0
      %655 = vmatprep.subr.bf16.mxu0 0
      %656 = vmatpush1.bf16.msra.mxu0 0
      %657 = vmatprep.subr.bf16.mxu0 0
      %658 = vmatpush1.bf16.msra.mxu0 0
      %659 = vmatprep.subr.bf16.mxu0 0
      %660 = vmatpush1.bf16.msra.mxu0 0
      %661 = vmatprep.subr.bf16.mxu0 0
      %662 = vmatpush1.bf16.msra.mxu0 0
      %663 = vmatprep.subr.bf16.mxu0 0
      %664 = vmatpush1.bf16.msra.mxu0 0
      %665 = vmatprep.subr.bf16.mxu0 0
      %666 = vmatpush1.bf16.msra.mxu0 0
      %667 = vmatprep.mubr.bf16.mxu0 0
      %668 = vmatmul.mubr.bf16.gmra.mrb[0].mxu0 %v621
      %v669 = vpop.f32.mrb[0].mxu0
      %v670 = vadd.f32 0.0, %v669
      %v671 = vpop.f32.mrb[0].mxu0
      %v672 = vpop.f32.mrb[0].mxu0
      %v673 = vadd.f32 0.0, %v672
      %v674 = vpop.f32.mrb[0].mxu0
      %675 = vmatprep.mubr.bf16.mxu0 0
      %676 = vmatmul.mubr.bf16.gmra.mrb[0].mxu0 %v624
      %v677 = vpop.f32.mrb[0].mxu0
      %v678 = vadd.f32 0.0, %v677
      %v679 = vpop.f32.mrb[0].mxu0
      %v680 = vpop.f32.mrb[0].mxu0
      %v681 = vadd.f32 0.0, %v680
      %v682 = vpop.f32.mrb[0].mxu0
      %683 = vmatprep.mubr.bf16.mxu0 0
      %684 = vmatmul.mubr.bf16.gmra.mrb[0].mxu0 %v627
      %v685 = vpop.f32.mrb[0].mxu0
      %v686 = vadd.f32 0.0, %v685
      %v687 = vpop.f32.mrb[0].mxu0
      %v688 = vpop.f32.mrb[0].mxu0
      %v689 = vadd.f32 0.0, %v688
      %v690 = vpop.f32.mrb[0].mxu0
      %691 = vmatprep.mubr.bf16.mxu0 0
      %692 = vmatmul.mubr.bf16.gmra.mrb[0].mxu0 %v630
      %v693 = vpop.f32.mrb[0].mxu0
      %v694 = vadd.f32 0.0, %v693
      %v695 = vpop.f32.mrb[0].mxu0
      %v696 = vpop.f32.mrb[0].mxu0
      %v697 = vadd.f32 0.0, %v696
      %v698 = vpop.f32.mrb[0].mxu0
      %699 = vdwg.mxu0
      %v700 = vadd.f32 %v582, %v670
      %v701 = vadd.f32 %v583, %v673
      %v702 = vadd.f32 %v584, %v678
      %v703 = vadd.f32 %v585, %v681
      %v704 = vadd.f32 %v586, %v686
      %v705 = vadd.f32 %v587, %v689
      %v706 = vadd.f32 %v588, %v694
      %v707 = vadd.f32 %v589, %v697
      %v708 = vld [vmem:[%s258 + $0x4] sm:$0xf]
      %v709 = vld [vmem:[%s258 + $0x8] sm:$0xf]
      %v710 = vld [vmem:[%s258 + $0xc] sm:$0xf]
      %v711 = vld [vmem:[%s258 + $0x10] sm:$0xf]
      %v712 = vld [vmem:[%s258 + $0x14] sm:$0xf]
      %v713 = vld [vmem:[%s258 + $0x18] sm:$0xf]
      %v714 = vld [vmem:[%s258 + $0x1c] sm:$0xf]
      %v715 = vld [vmem:[%s258 + $0x20] sm:$0xf]
      %s716 = scalar_lea.vmem %s1, 16
      %v717 = vld [vmem:[%s716] sm:$0xf]
      %v726 = vunpack.c.l.b16 %v708
      %v727 = vunpack.c.l.b16 %v709
      %v728 = vunpack.c.l.b16 %v710
      %v729 = vunpack.c.l.b16 %v711
      %v730 = vunpack.c.l.b16 %v712
      %v731 = vunpack.c.l.b16 %v713
      %v732 = vunpack.c.l.b16 %v714
      %v733 = vunpack.c.l.b16 %v715
      %v734 = vpack.c.b16 %v727, %v726
      %v735 = vpack.c.b16 %v729, %v728
      %v736 = vpack.c.b16 %v731, %v730
      %v737 = vpack.c.b16 %v733, %v732
      %v739 = vsel %vm289, %v734, 0
      %v742 = vsel %vm289, %v735, 0
      %v745 = vsel %vm289, %v736, 0
      %v748 = vsel %vm289, %v737, 0
      %v751 = vsel %vm302, %v717, 0
      %753 = vmatprep.subr.bf16.mxu0 0
      %754 = vmatpush1.bf16.msra.mxu0 %v751
      %755 = vmatprep.subr.bf16.mxu0 0
      %756 = vmatpush1.bf16.msra.mxu0 0
      %757 = vmatprep.subr.bf16.mxu0 0
      %758 = vmatpush1.bf16.msra.mxu0 0
      %759 = vmatprep.subr.bf16.mxu0 0
      %760 = vmatpush1.bf16.msra.mxu0 0
      %761 = vmatprep.subr.bf16.mxu0 0
      %762 = vmatpush1.bf16.msra.mxu0 0
      %763 = vmatprep.subr.bf16.mxu0 0
      %764 = vmatpush1.bf16.msra.mxu0 0
      %765 = vmatprep.subr.bf16.mxu0 0
      %766 = vmatpush1.bf16.msra.mxu0 0
      %767 = vmatprep.subr.bf16.mxu0 0
      %768 = vmatpush1.bf16.msra.mxu0 0
      %769 = vmatprep.subr.bf16.mxu0 0
      %770 = vmatpush1.bf16.msra.mxu0 0
      %771 = vmatprep.subr.bf16.mxu0 0
      %772 = vmatpush1.bf16.msra.mxu0 0
      %773 = vmatprep.subr.bf16.mxu0 0
      %774 = vmatpush1.bf16.msra.mxu0 0
      %775 = vmatprep.subr.bf16.mxu0 0
      %776 = vmatpush1.bf16.msra.mxu0 0
      %777 = vmatprep.subr.bf16.mxu0 0
      %778 = vmatpush1.bf16.msra.mxu0 0
      %779 = vmatprep.subr.bf16.mxu0 0
      %780 = vmatpush1.bf16.msra.mxu0 0
      %781 = vmatprep.subr.bf16.mxu0 0
      %782 = vmatpush1.bf16.msra.mxu0 0
      %783 = vmatprep.subr.bf16.mxu0 0
      %784 = vmatpush1.bf16.msra.mxu0 0
      %785 = vmatprep.mubr.bf16.mxu0 0
      %786 = vmatmul.mubr.bf16.gmra.mrb[0].mxu0 %v739
      %v787 = vpop.f32.mrb[0].mxu0
      %v788 = vadd.f32 0.0, %v787
      %v789 = vpop.f32.mrb[0].mxu0
      %v790 = vpop.f32.mrb[0].mxu0
      %v791 = vadd.f32 0.0, %v790
      %v792 = vpop.f32.mrb[0].mxu0
      %793 = vmatprep.mubr.bf16.mxu0 0
      %794 = vmatmul.mubr.bf16.gmra.mrb[0].mxu0 %v742
      %v795 = vpop.f32.mrb[0].mxu0
      %v796 = vadd.f32 0.0, %v795
      %v797 = vpop.f32.mrb[0].mxu0
      %v798 = vpop.f32.mrb[0].mxu0
      %v799 = vadd.f32 0.0, %v798
      %v800 = vpop.f32.mrb[0].mxu0
      %801 = vmatprep.mubr.bf16.mxu0 0
      %802 = vmatmul.mubr.bf16.gmra.mrb[0].mxu0 %v745
      %v803 = vpop.f32.mrb[0].mxu0
      %v804 = vadd.f32 0.0, %v803
      %v805 = vpop.f32.mrb[0].mxu0
      %v806 = vpop.f32.mrb[0].mxu0
      %v807 = vadd.f32 0.0, %v806
      %v808 = vpop.f32.mrb[0].mxu0
      %809 = vmatprep.mubr.bf16.mxu0 0
      %810 = vmatmul.mubr.bf16.gmra.mrb[0].mxu0 %v748
      %v811 = vpop.f32.mrb[0].mxu0
      %v812 = vadd.f32 0.0, %v811
      %v813 = vpop.f32.mrb[0].mxu0
      %v814 = vpop.f32.mrb[0].mxu0
      %v815 = vadd.f32 0.0, %v814
      %v816 = vpop.f32.mrb[0].mxu0
      %817 = vdwg.mxu0
      %v818 = vadd.f32 %v700, %v788
      %v819 = vadd.f32 %v701, %v791
      %v820 = vadd.f32 %v702, %v796
      %v821 = vadd.f32 %v703, %v799
      %v822 = vadd.f32 %v704, %v804
      %v823 = vadd.f32 %v705, %v807
      %v824 = vadd.f32 %v706, %v812
      %v825 = vadd.f32 %v707, %v815
      %v826 = vld [vmem:[%s471 + $0x4] sm:$0xf]
      %v827 = vld [vmem:[%s471 + $0x8] sm:$0xf]
      %v828 = vld [vmem:[%s471 + $0xc] sm:$0xf]
      %v829 = vld [vmem:[%s471 + $0x10] sm:$0xf]
      %v830 = vld [vmem:[%s471 + $0x14] sm:$0xf]
      %v831 = vld [vmem:[%s471 + $0x18] sm:$0xf]
      %v832 = vld [vmem:[%s471 + $0x1c] sm:$0xf]
      %v833 = vld [vmem:[%s471 + $0x20] sm:$0xf]
      %s834 = scalar_lea.vmem %s1, 20
      %v835 = vld [vmem:[%s834] sm:$0xf]
      %v844 = vunpack.c.l.b16 %v826
      %v845 = vunpack.c.l.b16 %v827
      %v846 = vunpack.c.l.b16 %v828
      %v847 = vunpack.c.l.b16 %v829
      %v848 = vunpack.c.l.b16 %v830
      %v849 = vunpack.c.l.b16 %v831
      %v850 = vunpack.c.l.b16 %v832
      %v851 = vunpack.c.l.b16 %v833
      %v852 = vpack.c.b16 %v845, %v844
      %v853 = vpack.c.b16 %v847, %v846
      %v854 = vpack.c.b16 %v849, %v848
      %v855 = vpack.c.b16 %v851, %v850
      %v857 = vsel %vm289, %v852, 0
      %v860 = vsel %vm289, %v853, 0
      %v863 = vsel %vm289, %v854, 0
      %v866 = vsel %vm289, %v855, 0
      %v869 = vsel %vm302, %v835, 0
      %871 = vmatprep.subr.bf16.mxu0 0
      %872 = vmatpush1.bf16.msra.mxu0 %v869
      %873 = vmatprep.subr.bf16.mxu0 0
      %874 = vmatpush1.bf16.msra.mxu0 0
      %875 = vmatprep.subr.bf16.mxu0 0
      %876 = vmatpush1.bf16.msra.mxu0 0
      %877 = vmatprep.subr.bf16.mxu0 0
      %878 = vmatpush1.bf16.msra.mxu0 0
      %879 = vmatprep.subr.bf16.mxu0 0
      %880 = vmatpush1.bf16.msra.mxu0 0
      %881 = vmatprep.subr.bf16.mxu0 0
      %882 = vmatpush1.bf16.msra.mxu0 0
      %883 = vmatprep.subr.bf16.mxu0 0
      %884 = vmatpush1.bf16.msra.mxu0 0
      %885 = vmatprep.subr.bf16.mxu0 0
      %886 = vmatpush1.bf16.msra.mxu0 0
      %887 = vmatprep.subr.bf16.mxu0 0
      %888 = vmatpush1.bf16.msra.mxu0 0
      %889 = vmatprep.subr.bf16.mxu0 0
      %890 = vmatpush1.bf16.msra.mxu0 0
      %891 = vmatprep.subr.bf16.mxu0 0
      %892 = vmatpush1.bf16.msra.mxu0 0
      %893 = vmatprep.subr.bf16.mxu0 0
      %894 = vmatpush1.bf16.msra.mxu0 0
      %895 = vmatprep.subr.bf16.mxu0 0
      %896 = vmatpush1.bf16.msra.mxu0 0
      %897 = vmatprep.subr.bf16.mxu0 0
      %898 = vmatpush1.bf16.msra.mxu0 0
      %899 = vmatprep.subr.bf16.mxu0 0
      %900 = vmatpush1.bf16.msra.mxu0 0
      %901 = vmatprep.subr.bf16.mxu0 0
      %902 = vmatpush1.bf16.msra.mxu0 0
      %903 = vmatprep.mubr.bf16.mxu0 0
      %904 = vmatmul.mubr.bf16.gmra.mrb[0].mxu0 %v857
      %v905 = vpop.f32.mrb[0].mxu0
      %v906 = vadd.f32 0.0, %v905
      %v907 = vpop.f32.mrb[0].mxu0
      %v908 = vpop.f32.mrb[0].mxu0
      %v909 = vadd.f32 0.0, %v908
      %v910 = vpop.f32.mrb[0].mxu0
      %911 = vmatprep.mubr.bf16.mxu0 0
      %912 = vmatmul.mubr.bf16.gmra.mrb[0].mxu0 %v860
      %v913 = vpop.f32.mrb[0].mxu0
      %v914 = vadd.f32 0.0, %v913
      %v915 = vpop.f32.mrb[0].mxu0
      %v916 = vpop.f32.mrb[0].mxu0
      %v917 = vadd.f32 0.0, %v916
      %v918 = vpop.f32.mrb[0].mxu0
      %919 = vmatprep.mubr.bf16.mxu0 0
      %920 = vmatmul.mubr.bf16.gmra.mrb[0].mxu0 %v863
      %v921 = vpop.f32.mrb[0].mxu0
      %v922 = vadd.f32 0.0, %v921
      %v923 = vpop.f32.mrb[0].mxu0
      %v924 = vpop.f32.mrb[0].mxu0
      %v925 = vadd.f32 0.0, %v924
      %v926 = vpop.f32.mrb[0].mxu0
      %927 = vmatprep.mubr.bf16.mxu0 0
      %928 = vmatmul.mubr.bf16.gmra.mrb[0].mxu0 %v866
      %v929 = vpop.f32.mrb[0].mxu0
      %v930 = vadd.f32 0.0, %v929
      %v931 = vpop.f32.mrb[0].mxu0
      %v932 = vpop.f32.mrb[0].mxu0
      %v933 = vadd.f32 0.0, %v932
      %v934 = vpop.f32.mrb[0].mxu0
      %935 = vdwg.mxu0
      %v936 = vadd.f32 %v818, %v906
      %v937 = vadd.f32 %v819, %v909
      %v938 = vadd.f32 %v820, %v914
      %v939 = vadd.f32 %v821, %v917
      %v940 = vadd.f32 %v822, %v922
      %v941 = vadd.f32 %v823, %v925
      %v942 = vadd.f32 %v824, %v930
      %v943 = vadd.f32 %v825, %v933
      %v944 = vld [vmem:[%s235 + $0x8] sm:$0xf]
      %v945 = vld [vmem:[%s235 + $0xc] sm:$0xf]
      %v946 = vld [vmem:[%s235 + $0x10] sm:$0xf]
      %v947 = vld [vmem:[%s235 + $0x14] sm:$0xf]
      %v948 = vld [vmem:[%s235 + $0x18] sm:$0xf]
      %v949 = vld [vmem:[%s235 + $0x1c] sm:$0xf]
      %v950 = vld [vmem:[%s235 + $0x20] sm:$0xf]
      %v951 = vld [vmem:[%s235 + $0x24] sm:$0xf]
      %s952 = scalar_lea.vmem %s1, 24
      %v953 = vld [vmem:[%s952] sm:$0xf]
      %v962 = vunpack.c.l.b16 %v944
      %v963 = vunpack.c.l.b16 %v945
      %v964 = vunpack.c.l.b16 %v946
      %v965 = vunpack.c.l.b16 %v947
      %v966 = vunpack.c.l.b16 %v948
      %v967 = vunpack.c.l.b16 %v949
      %v968 = vunpack.c.l.b16 %v950
      %v969 = vunpack.c.l.b16 %v951
      %v970 = vpack.c.b16 %v963, %v962
      %v971 = vpack.c.b16 %v965, %v964
      %v972 = vpack.c.b16 %v967, %v966
      %v973 = vpack.c.b16 %v969, %v968
      %v975 = vsel %vm289, %v970, 0
      %v978 = vsel %vm289, %v971, 0
      %v981 = vsel %vm289, %v972, 0
      %v984 = vsel %vm289, %v973, 0
      %v987 = vsel %vm302, %v953, 0
      %989 = vmatprep.subr.bf16.mxu0 0
      %990 = vmatpush1.bf16.msra.mxu0 %v987
      %991 = vmatprep.subr.bf16.mxu0 0
      %992 = vmatpush1.bf16.msra.mxu0 0
      %993 = vmatprep.subr.bf16.mxu0 0
      %994 = vmatpush1.bf16.msra.mxu0 0
      %995 = vmatprep.subr.bf16.mxu0 0
      %996 = vmatpush1.bf16.msra.mxu0 0
      %997 = vmatprep.subr.bf16.mxu0 0
      %998 = vmatpush1.bf16.msra.mxu0 0
      %999 = vmatprep.subr.bf16.mxu0 0
      %1000 = vmatpush1.bf16.msra.mxu0 0
      %1001 = vmatprep.subr.bf16.mxu0 0
      %1002 = vmatpush1.bf16.msra.mxu0 0
      %1003 = vmatprep.subr.bf16.mxu0 0
      %1004 = vmatpush1.bf16.msra.mxu0 0
      %1005 = vmatprep.subr.bf16.mxu0 0
      %1006 = vmatpush1.bf16.msra.mxu0 0
      %1007 = vmatprep.subr.bf16.mxu0 0
      %1008 = vmatpush1.bf16.msra.mxu0 0
      %1009 = vmatprep.subr.bf16.mxu0 0
      %1010 = vmatpush1.bf16.msra.mxu0 0
      %1011 = vmatprep.subr.bf16.mxu0 0
      %1012 = vmatpush1.bf16.msra.mxu0 0
      %1013 = vmatprep.subr.bf16.mxu0 0
      %1014 = vmatpush1.bf16.msra.mxu0 0
      %1015 = vmatprep.subr.bf16.mxu0 0
      %1016 = vmatpush1.bf16.msra.mxu0 0
      %1017 = vmatprep.subr.bf16.mxu0 0
      %1018 = vmatpush1.bf16.msra.mxu0 0
      %1019 = vmatprep.subr.bf16.mxu0 0
      %1020 = vmatpush1.bf16.msra.mxu0 0
      %1021 = vmatprep.mubr.bf16.mxu0 0
      %1022 = vmatmul.mubr.bf16.gmra.mrb[0].mxu0 %v975
      %v1023 = vpop.f32.mrb[0].mxu0
      %v1024 = vadd.f32 0.0, %v1023
      %v1025 = vpop.f32.mrb[0].mxu0
      %v1026 = vpop.f32.mrb[0].mxu0
      %v1027 = vadd.f32 0.0, %v1026
      %v1028 = vpop.f32.mrb[0].mxu0
      %1029 = vmatprep.mubr.bf16.mxu0 0
      %1030 = vmatmul.mubr.bf16.gmra.mrb[0].mxu0 %v978
      %v1031 = vpop.f32.mrb[0].mxu0
      %v1032 = vadd.f32 0.0, %v1031
      %v1033 = vpop.f32.mrb[0].mxu0
      %v1034 = vpop.f32.mrb[0].mxu0
      %v1035 = vadd.f32 0.0, %v1034
      %v1036 = vpop.f32.mrb[0].mxu0
      %1037 = vmatprep.mubr.bf16.mxu0 0
      %1038 = vmatmul.mubr.bf16.gmra.mrb[0].mxu0 %v981
      %v1039 = vpop.f32.mrb[0].mxu0
      %v1040 = vadd.f32 0.0, %v1039
      %v1041 = vpop.f32.mrb[0].mxu0
      %v1042 = vpop.f32.mrb[0].mxu0
      %v1043 = vadd.f32 0.0, %v1042
      %v1044 = vpop.f32.mrb[0].mxu0
      %1045 = vmatprep.mubr.bf16.mxu0 0
      %1046 = vmatmul.mubr.bf16.gmra.mrb[0].mxu0 %v984
      %v1047 = vpop.f32.mrb[0].mxu0
      %v1048 = vadd.f32 0.0, %v1047
      %v1049 = vpop.f32.mrb[0].mxu0
      %v1050 = vpop.f32.mrb[0].mxu0
      %v1051 = vadd.f32 0.0, %v1050
      %v1052 = vpop.f32.mrb[0].mxu0
      %1053 = vdwg.mxu0
      %v1054 = vadd.f32 %v936, %v1024
      %v1055 = vadd.f32 %v937, %v1027
      %v1056 = vadd.f32 %v938, %v1032
      %v1057 = vadd.f32 %v939, %v1035
      %v1058 = vadd.f32 %v940, %v1040
      %v1059 = vadd.f32 %v941, %v1043
      %v1060 = vadd.f32 %v942, %v1048
      %v1061 = vadd.f32 %v943, %v1051
      %v1062 = vld [vmem:[%s258 + $0x8] sm:$0xf]
      %v1063 = vld [vmem:[%s258 + $0xc] sm:$0xf]
      %v1064 = vld [vmem:[%s258 + $0x10] sm:$0xf]
      %v1065 = vld [vmem:[%s258 + $0x14] sm:$0xf]
      %v1066 = vld [vmem:[%s258 + $0x18] sm:$0xf]
      %v1067 = vld [vmem:[%s258 + $0x1c] sm:$0xf]
      %v1068 = vld [vmem:[%s258 + $0x20] sm:$0xf]
      %v1069 = vld [vmem:[%s258 + $0x24] sm:$0xf]
      %s1070 = scalar_lea.vmem %s1, 28
      %v1071 = vld [vmem:[%s1070] sm:$0xf]
      %v1080 = vunpack.c.l.b16 %v1062
      %v1081 = vunpack.c.l.b16 %v1063
      %v1082 = vunpack.c.l.b16 %v1064
      %v1083 = vunpack.c.l.b16 %v1065
      %v1084 = vunpack.c.l.b16 %v1066
      %v1085 = vunpack.c.l.b16 %v1067
      %v1086 = vunpack.c.l.b16 %v1068
      %v1087 = vunpack.c.l.b16 %v1069
      %v1088 = vpack.c.b16 %v1081, %v1080
      %v1089 = vpack.c.b16 %v1083, %v1082
      %v1090 = vpack.c.b16 %v1085, %v1084
      %v1091 = vpack.c.b16 %v1087, %v1086
      %v1093 = vsel %vm289, %v1088, 0
      %v1096 = vsel %vm289, %v1089, 0
      %v1099 = vsel %vm289, %v1090, 0
      %v1102 = vsel %vm289, %v1091, 0
      %v1105 = vsel %vm302, %v1071, 0
      %1107 = vmatprep.subr.bf16.mxu0 0
      %1108 = vmatpush1.bf16.msra.mxu0 %v1105
      %1109 = vmatprep.subr.bf16.mxu0 0
      %1110 = vmatpush1.bf16.msra.mxu0 0
      %1111 = vmatprep.subr.bf16.mxu0 0
      %1112 = vmatpush1.bf16.msra.mxu0 0
      %1113 = vmatprep.subr.bf16.mxu0 0
      %1114 = vmatpush1.bf16.msra.mxu0 0
      %1115 = vmatprep.subr.bf16.mxu0 0
      %1116 = vmatpush1.bf16.msra.mxu0 0
      %1117 = vmatprep.subr.bf16.mxu0 0
      %1118 = vmatpush1.bf16.msra.mxu0 0
      %1119 = vmatprep.subr.bf16.mxu0 0
      %1120 = vmatpush1.bf16.msra.mxu0 0
      %1121 = vmatprep.subr.bf16.mxu0 0
      %1122 = vmatpush1.bf16.msra.mxu0 0
      %1123 = vmatprep.subr.bf16.mxu0 0
      %1124 = vmatpush1.bf16.msra.mxu0 0
      %1125 = vmatprep.subr.bf16.mxu0 0
      %1126 = vmatpush1.bf16.msra.mxu0 0
      %1127 = vmatprep.subr.bf16.mxu0 0
      %1128 = vmatpush1.bf16.msra.mxu0 0
      %1129 = vmatprep.subr.bf16.mxu0 0
      %1130 = vmatpush1.bf16.msra.mxu0 0
      %1131 = vmatprep.subr.bf16.mxu0 0
      %1132 = vmatpush1.bf16.msra.mxu0 0
      %1133 = vmatprep.subr.bf16.mxu0 0
      %1134 = vmatpush1.bf16.msra.mxu0 0
      %1135 = vmatprep.subr.bf16.mxu0 0
      %1136 = vmatpush1.bf16.msra.mxu0 0
      %1137 = vmatprep.subr.bf16.mxu0 0
      %1138 = vmatpush1.bf16.msra.mxu0 0
      %1139 = vmatprep.mubr.bf16.mxu0 0
      %1140 = vmatmul.mubr.bf16.gmra.mrb[0].mxu0 %v1093
      %v1141 = vpop.f32.mrb[0].mxu0
      %v1142 = vadd.f32 0.0, %v1141
      %v1143 = vpop.f32.mrb[0].mxu0
      %v1144 = vpop.f32.mrb[0].mxu0
      %v1145 = vadd.f32 0.0, %v1144
      %v1146 = vpop.f32.mrb[0].mxu0
      %1147 = vmatprep.mubr.bf16.mxu0 0
      %1148 = vmatmul.mubr.bf16.gmra.mrb[0].mxu0 %v1096
      %v1149 = vpop.f32.mrb[0].mxu0
      %v1150 = vadd.f32 0.0, %v1149
      %v1151 = vpop.f32.mrb[0].mxu0
      %v1152 = vpop.f32.mrb[0].mxu0
      %v1153 = vadd.f32 0.0, %v1152
      %v1154 = vpop.f32.mrb[0].mxu0
      %1155 = vmatprep.mubr.bf16.mxu0 0
      %1156 = vmatmul.mubr.bf16.gmra.mrb[0].mxu0 %v1099
      %v1157 = vpop.f32.mrb[0].mxu0
      %v1158 = vadd.f32 0.0, %v1157
      %v1159 = vpop.f32.mrb[0].mxu0
      %v1160 = vpop.f32.mrb[0].mxu0
      %v1161 = vadd.f32 0.0, %v1160
      %v1162 = vpop.f32.mrb[0].mxu0
      %1163 = vmatprep.mubr.bf16.mxu0 0
      %1164 = vmatmul.mubr.bf16.gmra.mrb[0].mxu0 %v1102
      %v1165 = vpop.f32.mrb[0].mxu0
      %v1166 = vadd.f32 0.0, %v1165
      %v1167 = vpop.f32.mrb[0].mxu0
      %v1168 = vpop.f32.mrb[0].mxu0
      %v1169 = vadd.f32 0.0, %v1168
      %v1170 = vpop.f32.mrb[0].mxu0
      %1171 = vdwg.mxu0
      %v1172 = vadd.f32 %v1054, %v1142
      %v1173 = vadd.f32 %v1055, %v1145
      %v1174 = vadd.f32 %v1056, %v1150
      %v1175 = vadd.f32 %v1057, %v1153
      %v1176 = vadd.f32 %v1058, %v1158
      %v1177 = vadd.f32 %v1059, %v1161
      %v1178 = vadd.f32 %v1060, %v1166
      %v1179 = vadd.f32 %v1061, %v1169
      %v1180 = vld [vmem:[%s471 + $0x8] sm:$0xf]
      %v1181 = vld [vmem:[%s471 + $0xc] sm:$0xf]
      %v1182 = vld [vmem:[%s471 + $0x10] sm:$0xf]
      %v1183 = vld [vmem:[%s471 + $0x14] sm:$0xf]
      %v1184 = vld [vmem:[%s471 + $0x18] sm:$0xf]
      %v1185 = vld [vmem:[%s471 + $0x1c] sm:$0xf]
      %v1186 = vld [vmem:[%s471 + $0x20] sm:$0xf]
      %v1187 = vld [vmem:[%s471 + $0x24] sm:$0xf]
      %s1188 = scalar_lea.vmem %s1, 32
      %v1189 = vld [vmem:[%s1188] sm:$0xf]
      %v1198 = vunpack.c.l.b16 %v1180
      %v1199 = vunpack.c.l.b16 %v1181
      %v1200 = vunpack.c.l.b16 %v1182
      %v1201 = vunpack.c.l.b16 %v1183
      %v1202 = vunpack.c.l.b16 %v1184
      %v1203 = vunpack.c.l.b16 %v1185
      %v1204 = vunpack.c.l.b16 %v1186
      %v1205 = vunpack.c.l.b16 %v1187
      %v1206 = vpack.c.b16 %v1199, %v1198
      %v1207 = vpack.c.b16 %v1201, %v1200
      %v1208 = vpack.c.b16 %v1203, %v1202
      %v1209 = vpack.c.b16 %v1205, %v1204
      %v1211 = vsel %vm289, %v1206, 0
      %v1214 = vsel %vm289, %v1207, 0
      %v1217 = vsel %vm289, %v1208, 0
      %v1220 = vsel %vm289, %v1209, 0
      %v1223 = vsel %vm302, %v1189, 0
      %1225 = vmatprep.subr.bf16.mxu0 0
      %1226 = vmatpush1.bf16.msra.mxu0 %v1223
      %1227 = vmatprep.subr.bf16.mxu0 0
      %1228 = vmatpush1.bf16.msra.mxu0 0
      %1229 = vmatprep.subr.bf16.mxu0 0
      %1230 = vmatpush1.bf16.msra.mxu0 0
      %1231 = vmatprep.subr.bf16.mxu0 0
      %1232 = vmatpush1.bf16.msra.mxu0 0
      %1233 = vmatprep.subr.bf16.mxu0 0
      %1234 = vmatpush1.bf16.msra.mxu0 0
      %1235 = vmatprep.subr.bf16.mxu0 0
      %1236 = vmatpush1.bf16.msra.mxu0 0
      %1237 = vmatprep.subr.bf16.mxu0 0
      %1238 = vmatpush1.bf16.msra.mxu0 0
      %1239 = vmatprep.subr.bf16.mxu0 0
      %1240 = vmatpush1.bf16.msra.mxu0 0
      %1241 = vmatprep.subr.bf16.mxu0 0
      %1242 = vmatpush1.bf16.msra.mxu0 0
      %1243 = vmatprep.subr.bf16.mxu0 0
      %1244 = vmatpush1.bf16.msra.mxu0 0
      %1245 = vmatprep.subr.bf16.mxu0 0
      %1246 = vmatpush1.bf16.msra.mxu0 0
      %1247 = vmatprep.subr.bf16.mxu0 0
      %1248 = vmatpush1.bf16.msra.mxu0 0
      %1249 = vmatprep.subr.bf16.mxu0 0
      %1250 = vmatpush1.bf16.msra.mxu0 0
      %1251 = vmatprep.subr.bf16.mxu0 0
      %1252 = vmatpush1.bf16.msra.mxu0 0
      %1253 = vmatprep.subr.bf16.mxu0 0
      %1254 = vmatpush1.bf16.msra.mxu0 0
      %1255 = vmatprep.subr.bf16.mxu0 0
      %1256 = vmatpush1.bf16.msra.mxu0 0
      %1257 = vmatprep.mubr.bf16.mxu0 0
      %1258 = vmatmul.mubr.bf16.gmra.mrb[0].mxu0 %v1211
      %v1259 = vpop.f32.mrb[0].mxu0
      %v1260 = vadd.f32 0.0, %v1259
      %v1261 = vpop.f32.mrb[0].mxu0
      %v1262 = vpop.f32.mrb[0].mxu0
      %v1263 = vadd.f32 0.0, %v1262
      %v1264 = vpop.f32.mrb[0].mxu0
      %1265 = vmatprep.mubr.bf16.mxu0 0
      %1266 = vmatmul.mubr.bf16.gmra.mrb[0].mxu0 %v1214
      %v1267 = vpop.f32.mrb[0].mxu0
      %v1268 = vadd.f32 0.0, %v1267
      %v1269 = vpop.f32.mrb[0].mxu0
      %v1270 = vpop.f32.mrb[0].mxu0
      %v1271 = vadd.f32 0.0, %v1270
      %v1272 = vpop.f32.mrb[0].mxu0
      %1273 = vmatprep.mubr.bf16.mxu0 0
      %1274 = vmatmul.mubr.bf16.gmra.mrb[0].mxu0 %v1217
      %v1275 = vpop.f32.mrb[0].mxu0
      %v1276 = vadd.f32 0.0, %v1275
      %v1277 = vpop.f32.mrb[0].mxu0
      %v1278 = vpop.f32.mrb[0].mxu0
      %v1279 = vadd.f32 0.0, %v1278
      %v1280 = vpop.f32.mrb[0].mxu0
      %1281 = vmatprep.mubr.bf16.mxu0 0
      %1282 = vmatmul.mubr.bf16.gmra.mrb[0].mxu0 %v1220
      %v1283 = vpop.f32.mrb[0].mxu0
      %v1284 = vadd.f32 0.0, %v1283
      %v1285 = vpop.f32.mrb[0].mxu0
      %v1286 = vpop.f32.mrb[0].mxu0
      %v1287 = vadd.f32 0.0, %v1286
      %v1288 = vpop.f32.mrb[0].mxu0
      %1289 = vdwg.mxu0
      %v1290 = vadd.f32 %v1172, %v1260
      %v1291 = vadd.f32 %v1173, %v1263
      %v1292 = vadd.f32 %v1174, %v1268
      %v1293 = vadd.f32 %v1175, %v1271
      %v1294 = vadd.f32 %v1176, %v1276
      %v1295 = vadd.f32 %v1177, %v1279
      %v1296 = vadd.f32 %v1178, %v1284
      %v1297 = vadd.f32 %v1179, %v1287
      %v1298 = vld [vmem:[%s2] sm:$0x1]
      %v1300 = vlaneseq
      %v1301 = vshrl.u32 %v1300, 7
      %v1302 = vsub.s32 0, %v1301
      %v1303 = vrot.slane %v1298, %v1302
      %v1305 = vadd.f32 %v1290, %v1303
      %v1306 = vadd.f32 %v1291, %v1303
      %v1307 = vadd.f32 %v1292, %v1303
      %v1308 = vadd.f32 %v1293, %v1303
      %v1309 = vadd.f32 %v1294, %v1303
      %v1310 = vadd.f32 %v1295, %v1303
      %v1311 = vadd.f32 %v1296, %v1303
      %v1312 = vadd.f32 %v1297, %v1303
      %v1313 = vld [vmem:[%s240] sm:$0xf]
      %v1314 = vld [vmem:[%s240 + $0x4] sm:$0xf]
      %v1315 = vld [vmem:[%s240 + $0x8] sm:$0xf]
      %v1316 = vld [vmem:[%s240 + $0xc] sm:$0xf]
      %v1317 = vld [vmem:[%s240 + $0x10] sm:$0xf]
      %v1318 = vld [vmem:[%s240 + $0x14] sm:$0xf]
      %v1319 = vld [vmem:[%s240 + $0x18] sm:$0xf]
      %v1320 = vld [vmem:[%s240 + $0x1c] sm:$0xf]
      %v1321 = vld [vmem:[%s4] sm:$0x3]
      %v1330 = vunpack.c.l.b16 %v1313
      %v1331 = vunpack.c.l.b16 %v1314
      %v1332 = vunpack.c.l.b16 %v1315
      %v1333 = vunpack.c.l.b16 %v1316
      %v1334 = vunpack.c.l.b16 %v1317
      %v1335 = vunpack.c.l.b16 %v1318
      %v1336 = vunpack.c.l.b16 %v1319
      %v1337 = vunpack.c.l.b16 %v1320
      %v1338 = vpack.c.b16 %v1331, %v1330
      %v1339 = vpack.c.b16 %v1333, %v1332
      %v1340 = vpack.c.b16 %v1335, %v1334
      %v1341 = vpack.c.b16 %v1337, %v1336
      %vm1342 = vcmask 31744
      %v1344 = vsel %vm1342, %v1338, 0
      %v1347 = vsel %vm1342, %v1339, 0
      %v1350 = vsel %vm1342, %v1340, 0
      %v1353 = vsel %vm1342, %v1341, 0
      %vm1355 = vcmask 1041408
      %v1357 = vsel %vm1355, %v1321, 0
      %1359 = vmatprep.subr.bf16.mxu0 0
      %1360 = vmatpush1.bf16.msra.mxu0 %v1357
      %1361 = vmatprep.subr.bf16.mxu0 0
      %1362 = vmatpush1.bf16.msra.mxu0 0
      %1363 = vmatprep.subr.bf16.mxu0 0
      %1364 = vmatpush1.bf16.msra.mxu0 0
      %1365 = vmatprep.subr.bf16.mxu0 0
      %1366 = vmatpush1.bf16.msra.mxu0 0
      %1367 = vmatprep.subr.bf16.mxu0 0
      %1368 = vmatpush1.bf16.msra.mxu0 0
      %1369 = vmatprep.subr.bf16.mxu0 0
      %1370 = vmatpush1.bf16.msra.mxu0 0
      %1371 = vmatprep.subr.bf16.mxu0 0
      %1372 = vmatpush1.bf16.msra.mxu0 0
      %1373 = vmatprep.subr.bf16.mxu0 0
      %1374 = vmatpush1.bf16.msra.mxu0 0
      %1375 = vmatprep.subr.bf16.mxu0 0
      %1376 = vmatpush1.bf16.msra.mxu0 0
      %1377 = vmatprep.subr.bf16.mxu0 0
      %1378 = vmatpush1.bf16.msra.mxu0 0
      %1379 = vmatprep.subr.bf16.mxu0 0
      %1380 = vmatpush1.bf16.msra.mxu0 0
      %1381 = vmatprep.subr.bf16.mxu0 0
      %1382 = vmatpush1.bf16.msra.mxu0 0
      %1383 = vmatprep.subr.bf16.mxu0 0
      %1384 = vmatpush1.bf16.msra.mxu0 0
      %1385 = vmatprep.subr.bf16.mxu0 0
      %1386 = vmatpush1.bf16.msra.mxu0 0
      %1387 = vmatprep.subr.bf16.mxu0 0
      %1388 = vmatpush1.bf16.msra.mxu0 0
      %1389 = vmatprep.subr.bf16.mxu0 0
      %1390 = vmatpush1.bf16.msra.mxu0 0
      %1391 = vmatprep.mubr.bf16.mxu0 0
      %1392 = vmatmul.mubr.bf16.gmra.mrb[0].mxu0 %v1344
      %v1393 = vpop.f32.mrb[0].mxu0
      %v1394 = vadd.f32 0.0, %v1393
      %v1395 = vpop.f32.mrb[0].mxu0
      %v1396 = vpop.f32.mrb[0].mxu0
      %v1397 = vadd.f32 0.0, %v1396
      %v1398 = vpop.f32.mrb[0].mxu0
      %1399 = vmatprep.mubr.bf16.mxu0 0
      %1400 = vmatmul.mubr.bf16.gmra.mrb[0].mxu0 %v1347
      %v1401 = vpop.f32.mrb[0].mxu0
      %v1402 = vadd.f32 0.0, %v1401
      %v1403 = vpop.f32.mrb[0].mxu0
      %v1404 = vpop.f32.mrb[0].mxu0
      %v1405 = vadd.f32 0.0, %v1404
      %v1406 = vpop.f32.mrb[0].mxu0
      %1407 = vmatprep.mubr.bf16.mxu0 0
      %1408 = vmatmul.mubr.bf16.gmra.mrb[0].mxu0 %v1350
      %v1409 = vpop.f32.mrb[0].mxu0
      %v1410 = vadd.f32 0.0, %v1409
      %v1411 = vpop.f32.mrb[0].mxu0
      %v1412 = vpop.f32.mrb[0].mxu0
      %v1413 = vadd.f32 0.0, %v1412
      %v1414 = vpop.f32.mrb[0].mxu0
      %1415 = vmatprep.mubr.bf16.mxu0 0
      %1416 = vmatmul.mubr.bf16.gmra.mrb[0].mxu0 %v1353
      %v1417 = vpop.f32.mrb[0].mxu0
      %v1418 = vadd.f32 0.0, %v1417
      %v1419 = vpop.f32.mrb[0].mxu0
      %v1420 = vpop.f32.mrb[0].mxu0
      %v1421 = vadd.f32 0.0, %v1420
      %v1422 = vpop.f32.mrb[0].mxu0
      %1423 = vdwg.mxu0
      %v1424 = vadd.f32 %v1305, %v1394
      %v1425 = vadd.f32 %v1306, %v1397
      %v1426 = vadd.f32 %v1307, %v1402
      %v1427 = vadd.f32 %v1308, %v1405
      %v1428 = vadd.f32 %v1309, %v1410
      %v1429 = vadd.f32 %v1310, %v1413
      %v1430 = vadd.f32 %v1311, %v1418
      %v1431 = vadd.f32 %v1312, %v1421
      %v1432 = vmax.f32 %v1424, 0.0
      %v1433 = vmax.f32 %v1425, 0.0
      %v1434 = vmax.f32 %v1426, 0.0
      %v1435 = vmax.f32 %v1427, 0.0
      %v1436 = vmax.f32 %v1428, 0.0
      %v1437 = vmax.f32 %v1429, 0.0
      %v1438 = vmax.f32 %v1430, 0.0
      %v1439 = vmax.f32 %v1431, 0.0
      %1440 = vst [vmem:[%s246] sm:$0xff] %v1432
      %1441 = vst [vmem:[%s246 + $0x8] sm:$0xff] %v1433
      %1442 = vst [vmem:[%s246 + $0x10] sm:$0xff] %v1434
      %1443 = vst [vmem:[%s246 + $0x18] sm:$0xff] %v1435
      %1444 = vst [vmem:[%s246 + $0x20] sm:$0xff] %v1436
      %1445 = vst [vmem:[%s246 + $0x28] sm:$0xff] %v1437
      %1446 = vst [vmem:[%s246 + $0x30] sm:$0xff] %v1438
      %1447 = vst [vmem:[%s246 + $0x38] sm:$0xff] %v1439
      %s1448 = smul.u32 8, %s16
      %p1449 = scmp.lt.s32.totalorder %s1448, 15
      %s1450 = scalar_select %p1449, %s1448, 15
      %s1451 = smul.addr %s1450, 8
      %s1452 = scalar_lea.vmem %s5, %s1451
      // Predicated region
      $region41: #{basic_block_forward.3} parent=39 // pred_check
        %p1453 = pneg %p149
      $region42: #{basic_block_forward.3} parent=39 // pred_check_branch
        %1455 = sbr.rel (%p1453) target = $region44
      $region43: #{basic_block_forward.3} parent=39 // pred_region
        %s1456 = smul.u32 8, %s16
      $region44: #{basic_block_forward.3} parent=39 // pred_fallthru
        _
    $region40: #{basic_block_forward.3} parent=5 // pred_fallthru
      _
    %p1457 = scmp.le.s32.totalorder 2, %s11
    // Predicated region
    $region45: #{basic_block_forward.3} parent=5 // pred_check
      %p1458 = pneg %p1457
    $region46: #{basic_block_forward.3} parent=5 // pred_check_branch
      %1460 = sbr.rel (%p1458) target = $region48
    $region47: #{basic_block_forward.3} parent=5 // pred_region
      %s1461 = ssub.s32 %s11, 2
      // Predicated region
      $region49: #{basic_block_forward.3} parent=47 // pred_check
        %p1462 = pneg %p155
      $region50: #{basic_block_forward.3} parent=47 // pred_check_branch
        %1464 = sbr.rel (%p1462) target = $region52
      $region51: #{basic_block_forward.3} parent=47 // pred_region
        %s1465 = smul.u32 8, %s17
        %p1466 = scmp.lt.s32.totalorder %s1465, 15
        %s1467 = scalar_select %p1466, %s1465, 15
        %s1468 = smul.addr %s1467, 8
        %s1469 = scalar_lea.vmem %s5, %s1468
      $region52: #{basic_block_forward.3} parent=47 // pred_fallthru
        _
    $region48: #{basic_block_forward.3} parent=5 // pred_fallthru
      _
  $region6: #{basic_block_forward.3} parent=0 // loop_footer
    %s15 = sadd.s32 1, %s11
  $region7: #{basic_block_forward.3} parent=0 // loop_footer_branch
    %10 = sbr.rel target = $region3
  $region8: #{basic_block_forward.3} parent=0 // loop_exit
    _

</llo_original>
